<compile_context>
chip_gen: v5e
topology: v5e:2x2
jax: 0.10.0
libtpu: 0.0.40
codegen_flags: <defaults>
</compile_context>

<pallas_src>
import jax
import jax.numpy as jnp
from jax.experimental import pallas as pl
from jax.experimental.pallas import tpu as pltpu


def _round_up(x, m):
    return (x + m - 1) // m * m


def _make_fused_lstm_kernel(num_layers, hidden_size, T, Bp):
    """kernel(x_ref, (w_ih, w_hh, b) * L, out_ref)."""
    H = hidden_size

    def kernel(*refs):
        x_ref = refs[0]
        weight_refs = refs[1:1 + 3 * num_layers]
        out_ref = refs[1 + 3 * num_layers]

        # Time-major flat sequence: row index = t * Bp + b.
        seq = x_ref[...]                                    # (T*Bp, D_in)
        h = jnp.zeros((Bp, H), jnp.float32)

        for layer in range(num_layers):                     # trace-time unroll
            wih_ref, whh_ref, b_ref = weight_refs[3 * layer:3 * layer + 3]

            # One big MXU matmul: input projection for ALL timesteps at once.
            gx = jnp.dot(seq, wih_ref[...],
                         preferred_element_type=jnp.float32) + b_ref[...]

            w_hh = whh_ref[...]                             # hoist weight load
            h = jnp.zeros((Bp, H), jnp.float32)
            c = jnp.zeros((Bp, H), jnp.float32)
            hs = []
            last_layer = layer == num_layers - 1

            for t in range(T):                              # fully unrolled, static slices
                # Only this small recurrent dot is on the serial path.
                g = gx[t * Bp:(t + 1) * Bp, :] + jnp.dot(
                    h, w_hh, preferred_element_type=jnp.float32)
                i_g = jax.nn.sigmoid(g[:, 0 * H:1 * H])
                f_g = jax.nn.sigmoid(g[:, 1 * H:2 * H])
                g_g = jnp.tanh(g[:, 2 * H:3 * H])
                o_g = jax.nn.sigmoid(g[:, 3 * H:4 * H])
                c = f_g * c + i_g * g_g
                h = o_g * jnp.tanh(c)
                if not last_layer:
                    hs.append(h)

            if not last_layer:
                # Hidden sequence for the next layer, kept entirely in vregs.
                seq = jnp.concatenate(hs, axis=0)           # (T*Bp, H)

        # Only the final hidden state of the last layer goes back to HBM.
        out_ref[...] = h.astype(out_ref.dtype)

    return kernel


def lstm_forward(x_nchw, params):
    """Reproduces LSTM.forward: returns {'features': (B, hidden_size)}."""
    B, C, T, F = x_nchw.shape
    D0 = C * F
    H = params[0][1].shape[0]
    num_layers = len(params)

    # PyTorch: x.permute(0, 2, 1, 3).reshape(B, T, -1)  ->  (B, T, C*F)
    x_btd = jnp.transpose(x_nchw, (0, 2, 1, 3)).reshape(B, T, D0)
    # Time-major, batch padded to the sublane tile so in-kernel slices align.
    Bp = max(8, _round_up(B, 8))
    x_tbd = jnp.transpose(x_btd, (1, 0, 2)).astype(jnp.float32)   # (T, B, D0)
    x_pad = jnp.zeros((T, Bp, D0), jnp.float32).at[:, :B, :].set(x_tbd)
    seq = x_pad.reshape(T * Bp, D0)                               # (T*Bp, D0)

    in_specs = [pl.BlockSpec((T * Bp, D0), lambda i: (0, 0))]
    args = [seq]
    for (w_ih, w_hh, b) in params:
        in_specs.append(pl.BlockSpec(w_ih.shape, lambda i: (0, 0)))
        in_specs.append(pl.BlockSpec(w_hh.shape, lambda i: (0, 0)))
        in_specs.append(pl.BlockSpec(b.shape, lambda i: (0, 0)))
        args += [w_ih, w_hh, b]

    kernel = _make_fused_lstm_kernel(num_layers, H, T, Bp)

    feats_pad = pl.pallas_call(
        kernel,
        out_shape=jax.ShapeDtypeStruct((Bp, H), jnp.float32),
        grid_spec=pltpu.PrefetchScalarGridSpec(
            num_scalar_prefetch=0,
            grid=(1,),  # single step: everything DMA'd to VMEM once
            in_specs=in_specs,
            out_specs=pl.BlockSpec((Bp, H), lambda i: (0, 0)),
        ),
        compiler_params=pltpu.CompilerParams(
            dimension_semantics=("arbitrary",),
        ),
    )(*args)
    return {"features": feats_pad[:B]}


def init_lstm_params(key, input_size, hidden_size, num_layers):
    """Deterministic synthetic params. Gate order [i, f, g, o] (PyTorch)."""
    params = []
    d_in = input_size
    for _ in range(num_layers):
        key, k1, k2, k3, k4 = jax.random.split(key, 5)
        scale = 1.0 / jnp.sqrt(hidden_size)
        w_ih = jax.random.uniform(k1, (d_in, 4 * hidden_size),
                                  minval=-scale, maxval=scale, dtype=jnp.float32)
        w_hh = jax.random.uniform(k2, (hidden_size, 4 * hidden_size),
                                  minval=-scale, maxval=scale, dtype=jnp.float32)
        b_ih = jax.random.uniform(k3, (4 * hidden_size,),
                                  minval=-scale, maxval=scale, dtype=jnp.float32)
        b_hh = jax.random.uniform(k4, (4 * hidden_size,),
                                  minval=-scale, maxval=scale, dtype=jnp.float32)
        params.append((w_ih, w_hh, (b_ih + b_hh)[None, :]))
        d_in = hidden_size
    return params


def lstm_forward_ref(x_nchw, params):
    """Pure-JAX reference (lax.scan) for correctness check."""
    B, C, T, F = x_nchw.shape
    x_btd = jnp.transpose(x_nchw, (0, 2, 1, 3)).reshape(B, T, C * F)
    seq = jnp.transpose(x_btd, (1, 0, 2))
    for (w_ih, w_hh, b) in params:
        H = w_hh.shape[0]

        def step(carry, x_t):
            h, c = carry
            gates = x_t @ w_ih + h @ w_hh + b
            i = jax.nn.sigmoid(gates[:, 0 * H:1 * H])
            f = jax.nn.sigmoid(gates[:, 1 * H:2 * H])
            g = jnp.tanh(gates[:, 2 * H:3 * H])
            o = jax.nn.sigmoid(gates[:, 3 * H:4 * H])
            c_new = f * c + i * g
            h_new = o * jnp.tanh(c_new)
            return (h_new, c_new), h_new

        init = (jnp.zeros((B, H), jnp.float32), jnp.zeros((B, H), jnp.float32))
        _, seq = jax.lax.scan(step, init, seq)
    return {"features": seq[-1]}


if __name__ == "__main__":
    # Shapes consistent with the module's forward:
    #   x: (B=2, C=4, T=8, F=16) -> LSTM input_size = C*F = 64
    B, C, T, F = 2, 4, 8, 16
    input_size = C * F
    hidden_size = 32
    num_layers = 2

    key = jax.random.PRNGKey(0)
    kx, kp = jax.random.split(key, 2)

    x = jax.random.normal(kx, (B, C, T, F), dtype=jnp.float32)
    params = init_lstm_params(kp, input_size, hidden_size, num_layers)

    fwd = jax.jit(lambda xx: lstm_forward(xx, params))
    out = fwd(x)
    feats = jax.block_until_ready(out["features"])
    assert feats.shape == (B, hidden_size), feats.shape

    ref = lstm_forward_ref(x, params)["features"]
    assert jnp.allclose(feats, ref, atol=1e-4, rtol=1e-4), (
        float(jnp.max(jnp.abs(feats - ref)))
    )

    print("KERNEL_OK")
</pallas_src>

<mosaic_0001>
module attributes {stable_mosaic.version = 11 : i64} {
  func.func @kernel(%arg0: i32, %arg1: memref<64x64xf32, #tpu.memory_space<vmem>>, %arg2: memref<64x128xf32, #tpu.memory_space<vmem>>, %arg3: memref<32x128xf32, #tpu.memory_space<vmem>>, %arg4: memref<1x128xf32, #tpu.memory_space<vmem>>, %arg5: memref<32x128xf32, #tpu.memory_space<vmem>>, %arg6: memref<32x128xf32, #tpu.memory_space<vmem>>, %arg7: memref<1x128xf32, #tpu.memory_space<vmem>>, %arg8: memref<8x32xf32, #tpu.memory_space<vmem>>) attributes {dimension_semantics = [#tpu.dimension_semantics<arbitrary>], iteration_bounds = array<i64: 1>, scalar_prefetch = 0 : i64, scratch_operands = 0 : i64, tpu.core_type = #tpu.core_type<tc>, window_params = [{pipeline_mode = #tpu.pipeline_mode<synchronous>, transform_indices = @transform_0, window_bounds = array<i64: 64, 64>}, {pipeline_mode = #tpu.pipeline_mode<synchronous>, transform_indices = @transform_1, window_bounds = array<i64: 64, 128>}, {pipeline_mode = #tpu.pipeline_mode<synchronous>, transform_indices = @transform_2, window_bounds = array<i64: 32, 128>}, {pipeline_mode = #tpu.pipeline_mode<synchronous>, transform_indices = @transform_3, window_bounds = array<i64: 1, 128>}, {pipeline_mode = #tpu.pipeline_mode<synchronous>, transform_indices = @transform_4, window_bounds = array<i64: 32, 128>}, {pipeline_mode = #tpu.pipeline_mode<synchronous>, transform_indices = @transform_5, window_bounds = array<i64: 32, 128>}, {pipeline_mode = #tpu.pipeline_mode<synchronous>, transform_indices = @transform_6, window_bounds = array<i64: 1, 128>}, {pipeline_mode = #tpu.pipeline_mode<synchronous>, transform_indices = @transform_7, window_bounds = array<i64: 8, 32>}]} {
    %c0 = arith.constant 0 : index
    %c0_0 = arith.constant 0 : index
    %0 = vector.load %arg1[%c0, %c0_0] : memref<64x64xf32, #tpu.memory_space<vmem>>, vector<64x64xf32>
    %c0_1 = arith.constant 0 : index
    %c0_2 = arith.constant 0 : index
    %1 = vector.load %arg2[%c0_1, %c0_2] : memref<64x128xf32, #tpu.memory_space<vmem>>, vector<64x128xf32>
    %cst = arith.constant dense<0.000000e+00> : vector<64x128xf32>
    %2 = tpu.matmul %0, %1, %cst {dimension_numbers = #tpu.dot_dimension_numbers<[1], [0], [0], [1], [0, 0, 1, 1], [], []>} : vector<64x64xf32>, vector<64x128xf32>, vector<64x128xf32> -> vector<64x128xf32>
    %c0_3 = arith.constant 0 : index
    %c0_4 = arith.constant 0 : index
    %3 = vector.load %arg4[%c0_3, %c0_4] : memref<1x128xf32, #tpu.memory_space<vmem>>, vector<1x128xf32>
    %4 = vector.broadcast %3 : vector<1x128xf32> to vector<64x128xf32>
    %5 = arith.addf %2, %4 : vector<64x128xf32>
    %c0_5 = arith.constant 0 : index
    %c0_6 = arith.constant 0 : index
    %6 = vector.load %arg3[%c0_5, %c0_6] : memref<32x128xf32, #tpu.memory_space<vmem>>, vector<32x128xf32>
    %cst_7 = arith.constant 0.000000e+00 : f32
    %7 = vector.broadcast %cst_7 : f32 to vector<8x32xf32>
    %cst_8 = arith.constant 0.000000e+00 : f32
    %8 = vector.broadcast %cst_8 : f32 to vector<8x32xf32>
    %9 = vector.extract_strided_slice %5 {offsets = [0, 0], sizes = [8, 128], strides = [1, 1]} : vector<64x128xf32> to vector<8x128xf32>
    %cst_9 = arith.constant dense<0.000000e+00> : vector<8x128xf32>
    %10 = tpu.matmul %7, %6, %cst_9 {dimension_numbers = #tpu.dot_dimension_numbers<[1], [0], [0], [1], [0, 0, 1, 1], [], []>} : vector<8x32xf32>, vector<32x128xf32>, vector<8x128xf32> -> vector<8x128xf32>
    %11 = arith.addf %9, %10 : vector<8x128xf32>
    %12 = vector.extract_strided_slice %11 {offsets = [0, 0], sizes = [8, 32], strides = [1, 1]} : vector<8x128xf32> to vector<8x32xf32>
    %13 = arith.negf %12 : vector<8x32xf32>
    %14 = math.exp %13 : vector<8x32xf32>
    %cst_10 = arith.constant 1.000000e+00 : f32
    %15 = vector.broadcast %cst_10 : f32 to vector<8x32xf32>
    %16 = arith.addf %15, %14 : vector<8x32xf32>
    %17 = arith.divf %15, %16 : vector<8x32xf32>
    %18 = vector.extract_strided_slice %11 {offsets = [0, 32], sizes = [8, 32], strides = [1, 1]} : vector<8x128xf32> to vector<8x32xf32>
    %19 = arith.negf %18 : vector<8x32xf32>
    %20 = math.exp %19 : vector<8x32xf32>
    %cst_11 = arith.constant 1.000000e+00 : f32
    %21 = vector.broadcast %cst_11 : f32 to vector<8x32xf32>
    %22 = arith.addf %21, %20 : vector<8x32xf32>
    %23 = arith.divf %21, %22 : vector<8x32xf32>
    %24 = vector.extract_strided_slice %11 {offsets = [0, 64], sizes = [8, 32], strides = [1, 1]} : vector<8x128xf32> to vector<8x32xf32>
    %25 = math.tanh %24 : vector<8x32xf32>
    %26 = vector.extract_strided_slice %11 {offsets = [0, 96], sizes = [8, 32], strides = [1, 1]} : vector<8x128xf32> to vector<8x32xf32>
    %27 = arith.negf %26 : vector<8x32xf32>
    %28 = math.exp %27 : vector<8x32xf32>
    %cst_12 = arith.constant 1.000000e+00 : f32
    %29 = vector.broadcast %cst_12 : f32 to vector<8x32xf32>
    %30 = arith.addf %29, %28 : vector<8x32xf32>
    %31 = arith.divf %29, %30 : vector<8x32xf32>
    %32 = arith.mulf %23, %8 : vector<8x32xf32>
    %33 = arith.mulf %17, %25 : vector<8x32xf32>
    %34 = arith.addf %32, %33 : vector<8x32xf32>
    %35 = math.tanh %34 : vector<8x32xf32>
    %36 = arith.mulf %31, %35 : vector<8x32xf32>
    %37 = vector.extract_strided_slice %5 {offsets = [8, 0], sizes = [8, 128], strides = [1, 1]} : vector<64x128xf32> to vector<8x128xf32>
    %cst_13 = arith.constant dense<0.000000e+00> : vector<8x128xf32>
    %38 = tpu.matmul %36, %6, %cst_13 {dimension_numbers = #tpu.dot_dimension_numbers<[1], [0], [0], [1], [0, 0, 1, 1], [], []>} : vector<8x32xf32>, vector<32x128xf32>, vector<8x128xf32> -> vector<8x128xf32>
    %39 = arith.addf %37, %38 : vector<8x128xf32>
    %40 = vector.extract_strided_slice %39 {offsets = [0, 0], sizes = [8, 32], strides = [1, 1]} : vector<8x128xf32> to vector<8x32xf32>
    %41 = arith.negf %40 : vector<8x32xf32>
    %42 = math.exp %41 : vector<8x32xf32>
    %cst_14 = arith.constant 1.000000e+00 : f32
    %43 = vector.broadcast %cst_14 : f32 to vector<8x32xf32>
    %44 = arith.addf %43, %42 : vector<8x32xf32>
    %45 = arith.divf %43, %44 : vector<8x32xf32>
    %46 = vector.extract_strided_slice %39 {offsets = [0, 32], sizes = [8, 32], strides = [1, 1]} : vector<8x128xf32> to vector<8x32xf32>
    %47 = arith.negf %46 : vector<8x32xf32>
    %48 = math.exp %47 : vector<8x32xf32>
    %cst_15 = arith.constant 1.000000e+00 : f32
    %49 = vector.broadcast %cst_15 : f32 to vector<8x32xf32>
    %50 = arith.addf %49, %48 : vector<8x32xf32>
    %51 = arith.divf %49, %50 : vector<8x32xf32>
    %52 = vector.extract_strided_slice %39 {offsets = [0, 64], sizes = [8, 32], strides = [1, 1]} : vector<8x128xf32> to vector<8x32xf32>
    %53 = math.tanh %52 : vector<8x32xf32>
    %54 = vector.extract_strided_slice %39 {offsets = [0, 96], sizes = [8, 32], strides = [1, 1]} : vector<8x128xf32> to vector<8x32xf32>
    %55 = arith.negf %54 : vector<8x32xf32>
    %56 = math.exp %55 : vector<8x32xf32>
    %cst_16 = arith.constant 1.000000e+00 : f32
    %57 = vector.broadcast %cst_16 : f32 to vector<8x32xf32>
    %58 = arith.addf %57, %56 : vector<8x32xf32>
    %59 = arith.divf %57, %58 : vector<8x32xf32>
    %60 = arith.mulf %51, %34 : vector<8x32xf32>
    %61 = arith.mulf %45, %53 : vector<8x32xf32>
    %62 = arith.addf %60, %61 : vector<8x32xf32>
    %63 = math.tanh %62 : vector<8x32xf32>
    %64 = arith.mulf %59, %63 : vector<8x32xf32>
    %65 = vector.extract_strided_slice %5 {offsets = [16, 0], sizes = [8, 128], strides = [1, 1]} : vector<64x128xf32> to vector<8x128xf32>
    %cst_17 = arith.constant dense<0.000000e+00> : vector<8x128xf32>
    %66 = tpu.matmul %64, %6, %cst_17 {dimension_numbers = #tpu.dot_dimension_numbers<[1], [0], [0], [1], [0, 0, 1, 1], [], []>} : vector<8x32xf32>, vector<32x128xf32>, vector<8x128xf32> -> vector<8x128xf32>
    %67 = arith.addf %65, %66 : vector<8x128xf32>
    %68 = vector.extract_strided_slice %67 {offsets = [0, 0], sizes = [8, 32], strides = [1, 1]} : vector<8x128xf32> to vector<8x32xf32>
    %69 = arith.negf %68 : vector<8x32xf32>
    %70 = math.exp %69 : vector<8x32xf32>
    %cst_18 = arith.constant 1.000000e+00 : f32
    %71 = vector.broadcast %cst_18 : f32 to vector<8x32xf32>
    %72 = arith.addf %71, %70 : vector<8x32xf32>
    %73 = arith.divf %71, %72 : vector<8x32xf32>
    %74 = vector.extract_strided_slice %67 {offsets = [0, 32], sizes = [8, 32], strides = [1, 1]} : vector<8x128xf32> to vector<8x32xf32>
    %75 = arith.negf %74 : vector<8x32xf32>
    %76 = math.exp %75 : vector<8x32xf32>
    %cst_19 = arith.constant 1.000000e+00 : f32
    %77 = vector.broadcast %cst_19 : f32 to vector<8x32xf32>
    %78 = arith.addf %77, %76 : vector<8x32xf32>
    %79 = arith.divf %77, %78 : vector<8x32xf32>
    %80 = vector.extract_strided_slice %67 {offsets = [0, 64], sizes = [8, 32], strides = [1, 1]} : vector<8x128xf32> to vector<8x32xf32>
    %81 = math.tanh %80 : vector<8x32xf32>
    %82 = vector.extract_strided_slice %67 {offsets = [0, 96], sizes = [8, 32], strides = [1, 1]} : vector<8x128xf32> to vector<8x32xf32>
    %83 = arith.negf %82 : vector<8x32xf32>
    %84 = math.exp %83 : vector<8x32xf32>
    %cst_20 = arith.constant 1.000000e+00 : f32
    %85 = vector.broadcast %cst_20 : f32 to vector<8x32xf32>
    %86 = arith.addf %85, %84 : vector<8x32xf32>
    %87 = arith.divf %85, %86 : vector<8x32xf32>
    %88 = arith.mulf %79, %62 : vector<8x32xf32>
    %89 = arith.mulf %73, %81 : vector<8x32xf32>
    %90 = arith.addf %88, %89 : vector<8x32xf32>
    %91 = math.tanh %90 : vector<8x32xf32>
    %92 = arith.mulf %87, %91 : vector<8x32xf32>
    %93 = vector.extract_strided_slice %5 {offsets = [24, 0], sizes = [8, 128], strides = [1, 1]} : vector<64x128xf32> to vector<8x128xf32>
    %cst_21 = arith.constant dense<0.000000e+00> : vector<8x128xf32>
    %94 = tpu.matmul %92, %6, %cst_21 {dimension_numbers = #tpu.dot_dimension_numbers<[1], [0], [0], [1], [0, 0, 1, 1], [], []>} : vector<8x32xf32>, vector<32x128xf32>, vector<8x128xf32> -> vector<8x128xf32>
    %95 = arith.addf %93, %94 : vector<8x128xf32>
    %96 = vector.extract_strided_slice %95 {offsets = [0, 0], sizes = [8, 32], strides = [1, 1]} : vector<8x128xf32> to vector<8x32xf32>
    %97 = arith.negf %96 : vector<8x32xf32>
    %98 = math.exp %97 : vector<8x32xf32>
    %cst_22 = arith.constant 1.000000e+00 : f32
    %99 = vector.broadcast %cst_22 : f32 to vector<8x32xf32>
    %100 = arith.addf %99, %98 : vector<8x32xf32>
    %101 = arith.divf %99, %100 : vector<8x32xf32>
    %102 = vector.extract_strided_slice %95 {offsets = [0, 32], sizes = [8, 32], strides = [1, 1]} : vector<8x128xf32> to vector<8x32xf32>
    %103 = arith.negf %102 : vector<8x32xf32>
    %104 = math.exp %103 : vector<8x32xf32>
    %cst_23 = arith.constant 1.000000e+00 : f32
    %105 = vector.broadcast %cst_23 : f32 to vector<8x32xf32>
    %106 = arith.addf %105, %104 : vector<8x32xf32>
    %107 = arith.divf %105, %106 : vector<8x32xf32>
    %108 = vector.extract_strided_slice %95 {offsets = [0, 64], sizes = [8, 32], strides = [1, 1]} : vector<8x128xf32> to vector<8x32xf32>
    %109 = math.tanh %108 : vector<8x32xf32>
    %110 = vector.extract_strided_slice %95 {offsets = [0, 96], sizes = [8, 32], strides = [1, 1]} : vector<8x128xf32> to vector<8x32xf32>
    %111 = arith.negf %110 : vector<8x32xf32>
    %112 = math.exp %111 : vector<8x32xf32>
    %cst_24 = arith.constant 1.000000e+00 : f32
    %113 = vector.broadcast %cst_24 : f32 to vector<8x32xf32>
    %114 = arith.addf %113, %112 : vector<8x32xf32>
    %115 = arith.divf %113, %114 : vector<8x32xf32>
    %116 = arith.mulf %107, %90 : vector<8x32xf32>
    %117 = arith.mulf %101, %109 : vector<8x32xf32>
    %118 = arith.addf %116, %117 : vector<8x32xf32>
    %119 = math.tanh %118 : vector<8x32xf32>
    %120 = arith.mulf %115, %119 : vector<8x32xf32>
    %121 = vector.extract_strided_slice %5 {offsets = [32, 0], sizes = [8, 128], strides = [1, 1]} : vector<64x128xf32> to vector<8x128xf32>
    %cst_25 = arith.constant dense<0.000000e+00> : vector<8x128xf32>
    %122 = tpu.matmul %120, %6, %cst_25 {dimension_numbers = #tpu.dot_dimension_numbers<[1], [0], [0], [1], [0, 0, 1, 1], [], []>} : vector<8x32xf32>, vector<32x128xf32>, vector<8x128xf32> -> vector<8x128xf32>
    %123 = arith.addf %121, %122 : vector<8x128xf32>
    %124 = vector.extract_strided_slice %123 {offsets = [0, 0], sizes = [8, 32], strides = [1, 1]} : vector<8x128xf32> to vector<8x32xf32>
    %125 = arith.negf %124 : vector<8x32xf32>
    %126 = math.exp %125 : vector<8x32xf32>
    %cst_26 = arith.constant 1.000000e+00 : f32
    %127 = vector.broadcast %cst_26 : f32 to vector<8x32xf32>
    %128 = arith.addf %127, %126 : vector<8x32xf32>
    %129 = arith.divf %127, %128 : vector<8x32xf32>
    %130 = vector.extract_strided_slice %123 {offsets = [0, 32], sizes = [8, 32], strides = [1, 1]} : vector<8x128xf32> to vector<8x32xf32>
    %131 = arith.negf %130 : vector<8x32xf32>
    %132 = math.exp %131 : vector<8x32xf32>
    %cst_27 = arith.constant 1.000000e+00 : f32
    %133 = vector.broadcast %cst_27 : f32 to vector<8x32xf32>
    %134 = arith.addf %133, %132 : vector<8x32xf32>
    %135 = arith.divf %133, %134 : vector<8x32xf32>
    %136 = vector.extract_strided_slice %123 {offsets = [0, 64], sizes = [8, 32], strides = [1, 1]} : vector<8x128xf32> to vector<8x32xf32>
    %137 = math.tanh %136 : vector<8x32xf32>
    %138 = vector.extract_strided_slice %123 {offsets = [0, 96], sizes = [8, 32], strides = [1, 1]} : vector<8x128xf32> to vector<8x32xf32>
    %139 = arith.negf %138 : vector<8x32xf32>
    %140 = math.exp %139 : vector<8x32xf32>
    %cst_28 = arith.constant 1.000000e+00 : f32
    %141 = vector.broadcast %cst_28 : f32 to vector<8x32xf32>
    %142 = arith.addf %141, %140 : vector<8x32xf32>
    %143 = arith.divf %141, %142 : vector<8x32xf32>
    %144 = arith.mulf %135, %118 : vector<8x32xf32>
    %145 = arith.mulf %129, %137 : vector<8x32xf32>
    %146 = arith.addf %144, %145 : vector<8x32xf32>
    %147 = math.tanh %146 : vector<8x32xf32>
    %148 = arith.mulf %143, %147 : vector<8x32xf32>
    %149 = vector.extract_strided_slice %5 {offsets = [40, 0], sizes = [8, 128], strides = [1, 1]} : vector<64x128xf32> to vector<8x128xf32>
    %cst_29 = arith.constant dense<0.000000e+00> : vector<8x128xf32>
    %150 = tpu.matmul %148, %6, %cst_29 {dimension_numbers = #tpu.dot_dimension_numbers<[1], [0], [0], [1], [0, 0, 1, 1], [], []>} : vector<8x32xf32>, vector<32x128xf32>, vector<8x128xf32> -> vector<8x128xf32>
    %151 = arith.addf %149, %150 : vector<8x128xf32>
    %152 = vector.extract_strided_slice %151 {offsets = [0, 0], sizes = [8, 32], strides = [1, 1]} : vector<8x128xf32> to vector<8x32xf32>
    %153 = arith.negf %152 : vector<8x32xf32>
    %154 = math.exp %153 : vector<8x32xf32>
    %cst_30 = arith.constant 1.000000e+00 : f32
    %155 = vector.broadcast %cst_30 : f32 to vector<8x32xf32>
    %156 = arith.addf %155, %154 : vector<8x32xf32>
    %157 = arith.divf %155, %156 : vector<8x32xf32>
    %158 = vector.extract_strided_slice %151 {offsets = [0, 32], sizes = [8, 32], strides = [1, 1]} : vector<8x128xf32> to vector<8x32xf32>
    %159 = arith.negf %158 : vector<8x32xf32>
    %160 = math.exp %159 : vector<8x32xf32>
    %cst_31 = arith.constant 1.000000e+00 : f32
    %161 = vector.broadcast %cst_31 : f32 to vector<8x32xf32>
    %162 = arith.addf %161, %160 : vector<8x32xf32>
    %163 = arith.divf %161, %162 : vector<8x32xf32>
    %164 = vector.extract_strided_slice %151 {offsets = [0, 64], sizes = [8, 32], strides = [1, 1]} : vector<8x128xf32> to vector<8x32xf32>
    %165 = math.tanh %164 : vector<8x32xf32>
    %166 = vector.extract_strided_slice %151 {offsets = [0, 96], sizes = [8, 32], strides = [1, 1]} : vector<8x128xf32> to vector<8x32xf32>
    %167 = arith.negf %166 : vector<8x32xf32>
    %168 = math.exp %167 : vector<8x32xf32>
    %cst_32 = arith.constant 1.000000e+00 : f32
    %169 = vector.broadcast %cst_32 : f32 to vector<8x32xf32>
    %170 = arith.addf %169, %168 : vector<8x32xf32>
    %171 = arith.divf %169, %170 : vector<8x32xf32>
    %172 = arith.mulf %163, %146 : vector<8x32xf32>
    %173 = arith.mulf %157, %165 : vector<8x32xf32>
    %174 = arith.addf %172, %173 : vector<8x32xf32>
    %175 = math.tanh %174 : vector<8x32xf32>
    %176 = arith.mulf %171, %175 : vector<8x32xf32>
    %177 = vector.extract_strided_slice %5 {offsets = [48, 0], sizes = [8, 128], strides = [1, 1]} : vector<64x128xf32> to vector<8x128xf32>
    %cst_33 = arith.constant dense<0.000000e+00> : vector<8x128xf32>
    %178 = tpu.matmul %176, %6, %cst_33 {dimension_numbers = #tpu.dot_dimension_numbers<[1], [0], [0], [1], [0, 0, 1, 1], [], []>} : vector<8x32xf32>, vector<32x128xf32>, vector<8x128xf32> -> vector<8x128xf32>
    %179 = arith.addf %177, %178 : vector<8x128xf32>
    %180 = vector.extract_strided_slice %179 {offsets = [0, 0], sizes = [8, 32], strides = [1, 1]} : vector<8x128xf32> to vector<8x32xf32>
    %181 = arith.negf %180 : vector<8x32xf32>
    %182 = math.exp %181 : vector<8x32xf32>
    %cst_34 = arith.constant 1.000000e+00 : f32
    %183 = vector.broadcast %cst_34 : f32 to vector<8x32xf32>
    %184 = arith.addf %183, %182 : vector<8x32xf32>
    %185 = arith.divf %183, %184 : vector<8x32xf32>
    %186 = vector.extract_strided_slice %179 {offsets = [0, 32], sizes = [8, 32], strides = [1, 1]} : vector<8x128xf32> to vector<8x32xf32>
    %187 = arith.negf %186 : vector<8x32xf32>
    %188 = math.exp %187 : vector<8x32xf32>
    %cst_35 = arith.constant 1.000000e+00 : f32
    %189 = vector.broadcast %cst_35 : f32 to vector<8x32xf32>
    %190 = arith.addf %189, %188 : vector<8x32xf32>
    %191 = arith.divf %189, %190 : vector<8x32xf32>
    %192 = vector.extract_strided_slice %179 {offsets = [0, 64], sizes = [8, 32], strides = [1, 1]} : vector<8x128xf32> to vector<8x32xf32>
    %193 = math.tanh %192 : vector<8x32xf32>
    %194 = vector.extract_strided_slice %179 {offsets = [0, 96], sizes = [8, 32], strides = [1, 1]} : vector<8x128xf32> to vector<8x32xf32>
    %195 = arith.negf %194 : vector<8x32xf32>
    %196 = math.exp %195 : vector<8x32xf32>
    %cst_36 = arith.constant 1.000000e+00 : f32
    %197 = vector.broadcast %cst_36 : f32 to vector<8x32xf32>
    %198 = arith.addf %197, %196 : vector<8x32xf32>
    %199 = arith.divf %197, %198 : vector<8x32xf32>
    %200 = arith.mulf %191, %174 : vector<8x32xf32>
    %201 = arith.mulf %185, %193 : vector<8x32xf32>
    %202 = arith.addf %200, %201 : vector<8x32xf32>
    %203 = math.tanh %202 : vector<8x32xf32>
    %204 = arith.mulf %199, %203 : vector<8x32xf32>
    %205 = vector.extract_strided_slice %5 {offsets = [56, 0], sizes = [8, 128], strides = [1, 1]} : vector<64x128xf32> to vector<8x128xf32>
    %cst_37 = arith.constant dense<0.000000e+00> : vector<8x128xf32>
    %206 = tpu.matmul %204, %6, %cst_37 {dimension_numbers = #tpu.dot_dimension_numbers<[1], [0], [0], [1], [0, 0, 1, 1], [], []>} : vector<8x32xf32>, vector<32x128xf32>, vector<8x128xf32> -> vector<8x128xf32>
    %207 = arith.addf %205, %206 : vector<8x128xf32>
    %208 = vector.extract_strided_slice %207 {offsets = [0, 0], sizes = [8, 32], strides = [1, 1]} : vector<8x128xf32> to vector<8x32xf32>
    %209 = arith.negf %208 : vector<8x32xf32>
    %210 = math.exp %209 : vector<8x32xf32>
    %cst_38 = arith.constant 1.000000e+00 : f32
    %211 = vector.broadcast %cst_38 : f32 to vector<8x32xf32>
    %212 = arith.addf %211, %210 : vector<8x32xf32>
    %213 = arith.divf %211, %212 : vector<8x32xf32>
    %214 = vector.extract_strided_slice %207 {offsets = [0, 32], sizes = [8, 32], strides = [1, 1]} : vector<8x128xf32> to vector<8x32xf32>
    %215 = arith.negf %214 : vector<8x32xf32>
    %216 = math.exp %215 : vector<8x32xf32>
    %cst_39 = arith.constant 1.000000e+00 : f32
    %217 = vector.broadcast %cst_39 : f32 to vector<8x32xf32>
    %218 = arith.addf %217, %216 : vector<8x32xf32>
    %219 = arith.divf %217, %218 : vector<8x32xf32>
    %220 = vector.extract_strided_slice %207 {offsets = [0, 64], sizes = [8, 32], strides = [1, 1]} : vector<8x128xf32> to vector<8x32xf32>
    %221 = math.tanh %220 : vector<8x32xf32>
    %222 = vector.extract_strided_slice %207 {offsets = [0, 96], sizes = [8, 32], strides = [1, 1]} : vector<8x128xf32> to vector<8x32xf32>
    %223 = arith.negf %222 : vector<8x32xf32>
    %224 = math.exp %223 : vector<8x32xf32>
    %cst_40 = arith.constant 1.000000e+00 : f32
    %225 = vector.broadcast %cst_40 : f32 to vector<8x32xf32>
    %226 = arith.addf %225, %224 : vector<8x32xf32>
    %227 = arith.divf %225, %226 : vector<8x32xf32>
    %228 = arith.mulf %219, %202 : vector<8x32xf32>
    %229 = arith.mulf %213, %221 : vector<8x32xf32>
    %230 = arith.addf %228, %229 : vector<8x32xf32>
    %231 = math.tanh %230 : vector<8x32xf32>
    %232 = arith.mulf %227, %231 : vector<8x32xf32>
    %233 = tpu.concatenate %36, %64, %92, %120, %148, %176, %204, %232 in 0 : vector<8x32xf32>, vector<8x32xf32>, vector<8x32xf32>, vector<8x32xf32>, vector<8x32xf32>, vector<8x32xf32>, vector<8x32xf32>, vector<8x32xf32> -> vector<64x32xf32>
    %c0_41 = arith.constant 0 : index
    %c0_42 = arith.constant 0 : index
    %234 = vector.load %arg5[%c0_41, %c0_42] : memref<32x128xf32, #tpu.memory_space<vmem>>, vector<32x128xf32>
    %cst_43 = arith.constant dense<0.000000e+00> : vector<64x128xf32>
    %235 = tpu.matmul %233, %234, %cst_43 {dimension_numbers = #tpu.dot_dimension_numbers<[1], [0], [0], [1], [0, 0, 1, 1], [], []>} : vector<64x32xf32>, vector<32x128xf32>, vector<64x128xf32> -> vector<64x128xf32>
    %c0_44 = arith.constant 0 : index
    %c0_45 = arith.constant 0 : index
    %236 = vector.load %arg7[%c0_44, %c0_45] : memref<1x128xf32, #tpu.memory_space<vmem>>, vector<1x128xf32>
    %237 = vector.broadcast %236 : vector<1x128xf32> to vector<64x128xf32>
    %238 = arith.addf %235, %237 : vector<64x128xf32>
    %c0_46 = arith.constant 0 : index
    %c0_47 = arith.constant 0 : index
    %239 = vector.load %arg6[%c0_46, %c0_47] : memref<32x128xf32, #tpu.memory_space<vmem>>, vector<32x128xf32>
    %cst_48 = arith.constant 0.000000e+00 : f32
    %240 = vector.broadcast %cst_48 : f32 to vector<8x32xf32>
    %cst_49 = arith.constant 0.000000e+00 : f32
    %241 = vector.broadcast %cst_49 : f32 to vector<8x32xf32>
    %242 = vector.extract_strided_slice %238 {offsets = [0, 0], sizes = [8, 128], strides = [1, 1]} : vector<64x128xf32> to vector<8x128xf32>
    %cst_50 = arith.constant dense<0.000000e+00> : vector<8x128xf32>
    %243 = tpu.matmul %240, %239, %cst_50 {dimension_numbers = #tpu.dot_dimension_numbers<[1], [0], [0], [1], [0, 0, 1, 1], [], []>} : vector<8x32xf32>, vector<32x128xf32>, vector<8x128xf32> -> vector<8x128xf32>
    %244 = arith.addf %242, %243 : vector<8x128xf32>
    %245 = vector.extract_strided_slice %244 {offsets = [0, 0], sizes = [8, 32], strides = [1, 1]} : vector<8x128xf32> to vector<8x32xf32>
    %246 = arith.negf %245 : vector<8x32xf32>
    %247 = math.exp %246 : vector<8x32xf32>
    %cst_51 = arith.constant 1.000000e+00 : f32
    %248 = vector.broadcast %cst_51 : f32 to vector<8x32xf32>
    %249 = arith.addf %248, %247 : vector<8x32xf32>
    %250 = arith.divf %248, %249 : vector<8x32xf32>
    %251 = vector.extract_strided_slice %244 {offsets = [0, 32], sizes = [8, 32], strides = [1, 1]} : vector<8x128xf32> to vector<8x32xf32>
    %252 = arith.negf %251 : vector<8x32xf32>
    %253 = math.exp %252 : vector<8x32xf32>
    %cst_52 = arith.constant 1.000000e+00 : f32
    %254 = vector.broadcast %cst_52 : f32 to vector<8x32xf32>
    %255 = arith.addf %254, %253 : vector<8x32xf32>
    %256 = arith.divf %254, %255 : vector<8x32xf32>
    %257 = vector.extract_strided_slice %244 {offsets = [0, 64], sizes = [8, 32], strides = [1, 1]} : vector<8x128xf32> to vector<8x32xf32>
    %258 = math.tanh %257 : vector<8x32xf32>
    %259 = vector.extract_strided_slice %244 {offsets = [0, 96], sizes = [8, 32], strides = [1, 1]} : vector<8x128xf32> to vector<8x32xf32>
    %260 = arith.negf %259 : vector<8x32xf32>
    %261 = math.exp %260 : vector<8x32xf32>
    %cst_53 = arith.constant 1.000000e+00 : f32
    %262 = vector.broadcast %cst_53 : f32 to vector<8x32xf32>
    %263 = arith.addf %262, %261 : vector<8x32xf32>
    %264 = arith.divf %262, %263 : vector<8x32xf32>
    %265 = arith.mulf %256, %241 : vector<8x32xf32>
    %266 = arith.mulf %250, %258 : vector<8x32xf32>
    %267 = arith.addf %265, %266 : vector<8x32xf32>
    %268 = math.tanh %267 : vector<8x32xf32>
    %269 = arith.mulf %264, %268 : vector<8x32xf32>
    %270 = vector.extract_strided_slice %238 {offsets = [8, 0], sizes = [8, 128], strides = [1, 1]} : vector<64x128xf32> to vector<8x128xf32>
    %cst_54 = arith.constant dense<0.000000e+00> : vector<8x128xf32>
    %271 = tpu.matmul %269, %239, %cst_54 {dimension_numbers = #tpu.dot_dimension_numbers<[1], [0], [0], [1], [0, 0, 1, 1], [], []>} : vector<8x32xf32>, vector<32x128xf32>, vector<8x128xf32> -> vector<8x128xf32>
    %272 = arith.addf %270, %271 : vector<8x128xf32>
    %273 = vector.extract_strided_slice %272 {offsets = [0, 0], sizes = [8, 32], strides = [1, 1]} : vector<8x128xf32> to vector<8x32xf32>
    %274 = arith.negf %273 : vector<8x32xf32>
    %275 = math.exp %274 : vector<8x32xf32>
    %cst_55 = arith.constant 1.000000e+00 : f32
    %276 = vector.broadcast %cst_55 : f32 to vector<8x32xf32>
    %277 = arith.addf %276, %275 : vector<8x32xf32>
    %278 = arith.divf %276, %277 : vector<8x32xf32>
    %279 = vector.extract_strided_slice %272 {offsets = [0, 32], sizes = [8, 32], strides = [1, 1]} : vector<8x128xf32> to vector<8x32xf32>
    %280 = arith.negf %279 : vector<8x32xf32>
    %281 = math.exp %280 : vector<8x32xf32>
    %cst_56 = arith.constant 1.000000e+00 : f32
    %282 = vector.broadcast %cst_56 : f32 to vector<8x32xf32>
    %283 = arith.addf %282, %281 : vector<8x32xf32>
    %284 = arith.divf %282, %283 : vector<8x32xf32>
    %285 = vector.extract_strided_slice %272 {offsets = [0, 64], sizes = [8, 32], strides = [1, 1]} : vector<8x128xf32> to vector<8x32xf32>
    %286 = math.tanh %285 : vector<8x32xf32>
    %287 = vector.extract_strided_slice %272 {offsets = [0, 96], sizes = [8, 32], strides = [1, 1]} : vector<8x128xf32> to vector<8x32xf32>
    %288 = arith.negf %287 : vector<8x32xf32>
    %289 = math.exp %288 : vector<8x32xf32>
    %cst_57 = arith.constant 1.000000e+00 : f32
    %290 = vector.broadcast %cst_57 : f32 to vector<8x32xf32>
    %291 = arith.addf %290, %289 : vector<8x32xf32>
    %292 = arith.divf %290, %291 : vector<8x32xf32>
    %293 = arith.mulf %284, %267 : vector<8x32xf32>
    %294 = arith.mulf %278, %286 : vector<8x32xf32>
    %295 = arith.addf %293, %294 : vector<8x32xf32>
    %296 = math.tanh %295 : vector<8x32xf32>
    %297 = arith.mulf %292, %296 : vector<8x32xf32>
    %298 = vector.extract_strided_slice %238 {offsets = [16, 0], sizes = [8, 128], strides = [1, 1]} : vector<64x128xf32> to vector<8x128xf32>
    %cst_58 = arith.constant dense<0.000000e+00> : vector<8x128xf32>
    %299 = tpu.matmul %297, %239, %cst_58 {dimension_numbers = #tpu.dot_dimension_numbers<[1], [0], [0], [1], [0, 0, 1, 1], [], []>} : vector<8x32xf32>, vector<32x128xf32>, vector<8x128xf32> -> vector<8x128xf32>
    %300 = arith.addf %298, %299 : vector<8x128xf32>
    %301 = vector.extract_strided_slice %300 {offsets = [0, 0], sizes = [8, 32], strides = [1, 1]} : vector<8x128xf32> to vector<8x32xf32>
    %302 = arith.negf %301 : vector<8x32xf32>
    %303 = math.exp %302 : vector<8x32xf32>
    %cst_59 = arith.constant 1.000000e+00 : f32
    %304 = vector.broadcast %cst_59 : f32 to vector<8x32xf32>
    %305 = arith.addf %304, %303 : vector<8x32xf32>
    %306 = arith.divf %304, %305 : vector<8x32xf32>
    %307 = vector.extract_strided_slice %300 {offsets = [0, 32], sizes = [8, 32], strides = [1, 1]} : vector<8x128xf32> to vector<8x32xf32>
    %308 = arith.negf %307 : vector<8x32xf32>
    %309 = math.exp %308 : vector<8x32xf32>
    %cst_60 = arith.constant 1.000000e+00 : f32
    %310 = vector.broadcast %cst_60 : f32 to vector<8x32xf32>
    %311 = arith.addf %310, %309 : vector<8x32xf32>
    %312 = arith.divf %310, %311 : vector<8x32xf32>
    %313 = vector.extract_strided_slice %300 {offsets = [0, 64], sizes = [8, 32], strides = [1, 1]} : vector<8x128xf32> to vector<8x32xf32>
    %314 = math.tanh %313 : vector<8x32xf32>
    %315 = vector.extract_strided_slice %300 {offsets = [0, 96], sizes = [8, 32], strides = [1, 1]} : vector<8x128xf32> to vector<8x32xf32>
    %316 = arith.negf %315 : vector<8x32xf32>
    %317 = math.exp %316 : vector<8x32xf32>
    %cst_61 = arith.constant 1.000000e+00 : f32
    %318 = vector.broadcast %cst_61 : f32 to vector<8x32xf32>
    %319 = arith.addf %318, %317 : vector<8x32xf32>
    %320 = arith.divf %318, %319 : vector<8x32xf32>
    %321 = arith.mulf %312, %295 : vector<8x32xf32>
    %322 = arith.mulf %306, %314 : vector<8x32xf32>
    %323 = arith.addf %321, %322 : vector<8x32xf32>
    %324 = math.tanh %323 : vector<8x32xf32>
    %325 = arith.mulf %320, %324 : vector<8x32xf32>
    %326 = vector.extract_strided_slice %238 {offsets = [24, 0], sizes = [8, 128], strides = [1, 1]} : vector<64x128xf32> to vector<8x128xf32>
    %cst_62 = arith.constant dense<0.000000e+00> : vector<8x128xf32>
    %327 = tpu.matmul %325, %239, %cst_62 {dimension_numbers = #tpu.dot_dimension_numbers<[1], [0], [0], [1], [0, 0, 1, 1], [], []>} : vector<8x32xf32>, vector<32x128xf32>, vector<8x128xf32> -> vector<8x128xf32>
    %328 = arith.addf %326, %327 : vector<8x128xf32>
    %329 = vector.extract_strided_slice %328 {offsets = [0, 0], sizes = [8, 32], strides = [1, 1]} : vector<8x128xf32> to vector<8x32xf32>
    %330 = arith.negf %329 : vector<8x32xf32>
    %331 = math.exp %330 : vector<8x32xf32>
    %cst_63 = arith.constant 1.000000e+00 : f32
    %332 = vector.broadcast %cst_63 : f32 to vector<8x32xf32>
    %333 = arith.addf %332, %331 : vector<8x32xf32>
    %334 = arith.divf %332, %333 : vector<8x32xf32>
    %335 = vector.extract_strided_slice %328 {offsets = [0, 32], sizes = [8, 32], strides = [1, 1]} : vector<8x128xf32> to vector<8x32xf32>
    %336 = arith.negf %335 : vector<8x32xf32>
    %337 = math.exp %336 : vector<8x32xf32>
    %cst_64 = arith.constant 1.000000e+00 : f32
    %338 = vector.broadcast %cst_64 : f32 to vector<8x32xf32>
    %339 = arith.addf %338, %337 : vector<8x32xf32>
    %340 = arith.divf %338, %339 : vector<8x32xf32>
    %341 = vector.extract_strided_slice %328 {offsets = [0, 64], sizes = [8, 32], strides = [1, 1]} : vector<8x128xf32> to vector<8x32xf32>
    %342 = math.tanh %341 : vector<8x32xf32>
    %343 = vector.extract_strided_slice %328 {offsets = [0, 96], sizes = [8, 32], strides = [1, 1]} : vector<8x128xf32> to vector<8x32xf32>
    %344 = arith.negf %343 : vector<8x32xf32>
    %345 = math.exp %344 : vector<8x32xf32>
    %cst_65 = arith.constant 1.000000e+00 : f32
    %346 = vector.broadcast %cst_65 : f32 to vector<8x32xf32>
    %347 = arith.addf %346, %345 : vector<8x32xf32>
    %348 = arith.divf %346, %347 : vector<8x32xf32>
    %349 = arith.mulf %340, %323 : vector<8x32xf32>
    %350 = arith.mulf %334, %342 : vector<8x32xf32>
    %351 = arith.addf %349, %350 : vector<8x32xf32>
    %352 = math.tanh %351 : vector<8x32xf32>
    %353 = arith.mulf %348, %352 : vector<8x32xf32>
    %354 = vector.extract_strided_slice %238 {offsets = [32, 0], sizes = [8, 128], strides = [1, 1]} : vector<64x128xf32> to vector<8x128xf32>
    %cst_66 = arith.constant dense<0.000000e+00> : vector<8x128xf32>
    %355 = tpu.matmul %353, %239, %cst_66 {dimension_numbers = #tpu.dot_dimension_numbers<[1], [0], [0], [1], [0, 0, 1, 1], [], []>} : vector<8x32xf32>, vector<32x128xf32>, vector<8x128xf32> -> vector<8x128xf32>
    %356 = arith.addf %354, %355 : vector<8x128xf32>
    %357 = vector.extract_strided_slice %356 {offsets = [0, 0], sizes = [8, 32], strides = [1, 1]} : vector<8x128xf32> to vector<8x32xf32>
    %358 = arith.negf %357 : vector<8x32xf32>
    %359 = math.exp %358 : vector<8x32xf32>
    %cst_67 = arith.constant 1.000000e+00 : f32
    %360 = vector.broadcast %cst_67 : f32 to vector<8x32xf32>
    %361 = arith.addf %360, %359 : vector<8x32xf32>
    %362 = arith.divf %360, %361 : vector<8x32xf32>
    %363 = vector.extract_strided_slice %356 {offsets = [0, 32], sizes = [8, 32], strides = [1, 1]} : vector<8x128xf32> to vector<8x32xf32>
    %364 = arith.negf %363 : vector<8x32xf32>
    %365 = math.exp %364 : vector<8x32xf32>
    %cst_68 = arith.constant 1.000000e+00 : f32
    %366 = vector.broadcast %cst_68 : f32 to vector<8x32xf32>
    %367 = arith.addf %366, %365 : vector<8x32xf32>
    %368 = arith.divf %366, %367 : vector<8x32xf32>
    %369 = vector.extract_strided_slice %356 {offsets = [0, 64], sizes = [8, 32], strides = [1, 1]} : vector<8x128xf32> to vector<8x32xf32>
    %370 = math.tanh %369 : vector<8x32xf32>
    %371 = vector.extract_strided_slice %356 {offsets = [0, 96], sizes = [8, 32], strides = [1, 1]} : vector<8x128xf32> to vector<8x32xf32>
    %372 = arith.negf %371 : vector<8x32xf32>
    %373 = math.exp %372 : vector<8x32xf32>
    %cst_69 = arith.constant 1.000000e+00 : f32
    %374 = vector.broadcast %cst_69 : f32 to vector<8x32xf32>
    %375 = arith.addf %374, %373 : vector<8x32xf32>
    %376 = arith.divf %374, %375 : vector<8x32xf32>
    %377 = arith.mulf %368, %351 : vector<8x32xf32>
    %378 = arith.mulf %362, %370 : vector<8x32xf32>
    %379 = arith.addf %377, %378 : vector<8x32xf32>
    %380 = math.tanh %379 : vector<8x32xf32>
    %381 = arith.mulf %376, %380 : vector<8x32xf32>
    %382 = vector.extract_strided_slice %238 {offsets = [40, 0], sizes = [8, 128], strides = [1, 1]} : vector<64x128xf32> to vector<8x128xf32>
    %cst_70 = arith.constant dense<0.000000e+00> : vector<8x128xf32>
    %383 = tpu.matmul %381, %239, %cst_70 {dimension_numbers = #tpu.dot_dimension_numbers<[1], [0], [0], [1], [0, 0, 1, 1], [], []>} : vector<8x32xf32>, vector<32x128xf32>, vector<8x128xf32> -> vector<8x128xf32>
    %384 = arith.addf %382, %383 : vector<8x128xf32>
    %385 = vector.extract_strided_slice %384 {offsets = [0, 0], sizes = [8, 32], strides = [1, 1]} : vector<8x128xf32> to vector<8x32xf32>
    %386 = arith.negf %385 : vector<8x32xf32>
    %387 = math.exp %386 : vector<8x32xf32>
    %cst_71 = arith.constant 1.000000e+00 : f32
    %388 = vector.broadcast %cst_71 : f32 to vector<8x32xf32>
    %389 = arith.addf %388, %387 : vector<8x32xf32>
    %390 = arith.divf %388, %389 : vector<8x32xf32>
    %391 = vector.extract_strided_slice %384 {offsets = [0, 32], sizes = [8, 32], strides = [1, 1]} : vector<8x128xf32> to vector<8x32xf32>
    %392 = arith.negf %391 : vector<8x32xf32>
    %393 = math.exp %392 : vector<8x32xf32>
    %cst_72 = arith.constant 1.000000e+00 : f32
    %394 = vector.broadcast %cst_72 : f32 to vector<8x32xf32>
    %395 = arith.addf %394, %393 : vector<8x32xf32>
    %396 = arith.divf %394, %395 : vector<8x32xf32>
    %397 = vector.extract_strided_slice %384 {offsets = [0, 64], sizes = [8, 32], strides = [1, 1]} : vector<8x128xf32> to vector<8x32xf32>
    %398 = math.tanh %397 : vector<8x32xf32>
    %399 = vector.extract_strided_slice %384 {offsets = [0, 96], sizes = [8, 32], strides = [1, 1]} : vector<8x128xf32> to vector<8x32xf32>
    %400 = arith.negf %399 : vector<8x32xf32>
    %401 = math.exp %400 : vector<8x32xf32>
    %cst_73 = arith.constant 1.000000e+00 : f32
    %402 = vector.broadcast %cst_73 : f32 to vector<8x32xf32>
    %403 = arith.addf %402, %401 : vector<8x32xf32>
    %404 = arith.divf %402, %403 : vector<8x32xf32>
    %405 = arith.mulf %396, %379 : vector<8x32xf32>
    %406 = arith.mulf %390, %398 : vector<8x32xf32>
    %407 = arith.addf %405, %406 : vector<8x32xf32>
    %408 = math.tanh %407 : vector<8x32xf32>
    %409 = arith.mulf %404, %408 : vector<8x32xf32>
    %410 = vector.extract_strided_slice %238 {offsets = [48, 0], sizes = [8, 128], strides = [1, 1]} : vector<64x128xf32> to vector<8x128xf32>
    %cst_74 = arith.constant dense<0.000000e+00> : vector<8x128xf32>
    %411 = tpu.matmul %409, %239, %cst_74 {dimension_numbers = #tpu.dot_dimension_numbers<[1], [0], [0], [1], [0, 0, 1, 1], [], []>} : vector<8x32xf32>, vector<32x128xf32>, vector<8x128xf32> -> vector<8x128xf32>
    %412 = arith.addf %410, %411 : vector<8x128xf32>
    %413 = vector.extract_strided_slice %412 {offsets = [0, 0], sizes = [8, 32], strides = [1, 1]} : vector<8x128xf32> to vector<8x32xf32>
    %414 = arith.negf %413 : vector<8x32xf32>
    %415 = math.exp %414 : vector<8x32xf32>
    %cst_75 = arith.constant 1.000000e+00 : f32
    %416 = vector.broadcast %cst_75 : f32 to vector<8x32xf32>
    %417 = arith.addf %416, %415 : vector<8x32xf32>
    %418 = arith.divf %416, %417 : vector<8x32xf32>
    %419 = vector.extract_strided_slice %412 {offsets = [0, 32], sizes = [8, 32], strides = [1, 1]} : vector<8x128xf32> to vector<8x32xf32>
    %420 = arith.negf %419 : vector<8x32xf32>
    %421 = math.exp %420 : vector<8x32xf32>
    %cst_76 = arith.constant 1.000000e+00 : f32
    %422 = vector.broadcast %cst_76 : f32 to vector<8x32xf32>
    %423 = arith.addf %422, %421 : vector<8x32xf32>
    %424 = arith.divf %422, %423 : vector<8x32xf32>
    %425 = vector.extract_strided_slice %412 {offsets = [0, 64], sizes = [8, 32], strides = [1, 1]} : vector<8x128xf32> to vector<8x32xf32>
    %426 = math.tanh %425 : vector<8x32xf32>
    %427 = vector.extract_strided_slice %412 {offsets = [0, 96], sizes = [8, 32], strides = [1, 1]} : vector<8x128xf32> to vector<8x32xf32>
    %428 = arith.negf %427 : vector<8x32xf32>
    %429 = math.exp %428 : vector<8x32xf32>
    %cst_77 = arith.constant 1.000000e+00 : f32
    %430 = vector.broadcast %cst_77 : f32 to vector<8x32xf32>
    %431 = arith.addf %430, %429 : vector<8x32xf32>
    %432 = arith.divf %430, %431 : vector<8x32xf32>
    %433 = arith.mulf %424, %407 : vector<8x32xf32>
    %434 = arith.mulf %418, %426 : vector<8x32xf32>
    %435 = arith.addf %433, %434 : vector<8x32xf32>
    %436 = math.tanh %435 : vector<8x32xf32>
    %437 = arith.mulf %432, %436 : vector<8x32xf32>
    %438 = vector.extract_strided_slice %238 {offsets = [56, 0], sizes = [8, 128], strides = [1, 1]} : vector<64x128xf32> to vector<8x128xf32>
    %cst_78 = arith.constant dense<0.000000e+00> : vector<8x128xf32>
    %439 = tpu.matmul %437, %239, %cst_78 {dimension_numbers = #tpu.dot_dimension_numbers<[1], [0], [0], [1], [0, 0, 1, 1], [], []>} : vector<8x32xf32>, vector<32x128xf32>, vector<8x128xf32> -> vector<8x128xf32>
    %440 = arith.addf %438, %439 : vector<8x128xf32>
    %441 = vector.extract_strided_slice %440 {offsets = [0, 0], sizes = [8, 32], strides = [1, 1]} : vector<8x128xf32> to vector<8x32xf32>
    %442 = arith.negf %441 : vector<8x32xf32>
    %443 = math.exp %442 : vector<8x32xf32>
    %cst_79 = arith.constant 1.000000e+00 : f32
    %444 = vector.broadcast %cst_79 : f32 to vector<8x32xf32>
    %445 = arith.addf %444, %443 : vector<8x32xf32>
    %446 = arith.divf %444, %445 : vector<8x32xf32>
    %447 = vector.extract_strided_slice %440 {offsets = [0, 32], sizes = [8, 32], strides = [1, 1]} : vector<8x128xf32> to vector<8x32xf32>
    %448 = arith.negf %447 : vector<8x32xf32>
    %449 = math.exp %448 : vector<8x32xf32>
    %cst_80 = arith.constant 1.000000e+00 : f32
    %450 = vector.broadcast %cst_80 : f32 to vector<8x32xf32>
    %451 = arith.addf %450, %449 : vector<8x32xf32>
    %452 = arith.divf %450, %451 : vector<8x32xf32>
    %453 = vector.extract_strided_slice %440 {offsets = [0, 64], sizes = [8, 32], strides = [1, 1]} : vector<8x128xf32> to vector<8x32xf32>
    %454 = math.tanh %453 : vector<8x32xf32>
    %455 = vector.extract_strided_slice %440 {offsets = [0, 96], sizes = [8, 32], strides = [1, 1]} : vector<8x128xf32> to vector<8x32xf32>
    %456 = arith.negf %455 : vector<8x32xf32>
    %457 = math.exp %456 : vector<8x32xf32>
    %cst_81 = arith.constant 1.000000e+00 : f32
    %458 = vector.broadcast %cst_81 : f32 to vector<8x32xf32>
    %459 = arith.addf %458, %457 : vector<8x32xf32>
    %460 = arith.divf %458, %459 : vector<8x32xf32>
    %461 = arith.mulf %452, %435 : vector<8x32xf32>
    %462 = arith.mulf %446, %454 : vector<8x32xf32>
    %463 = arith.addf %461, %462 : vector<8x32xf32>
    %464 = math.tanh %463 : vector<8x32xf32>
    %465 = arith.mulf %460, %464 : vector<8x32xf32>
    %c0_82 = arith.constant 0 : index
    %c0_83 = arith.constant 0 : index
    %466 = vector.load %arg8[%c0_82, %c0_83] : memref<8x32xf32, #tpu.memory_space<vmem>>, vector<8x32xf32>
    tpu.vector_store %arg8[%c0_82, %c0_83], %465 {strides = array<i32>} : memref<8x32xf32, #tpu.memory_space<vmem>>, vector<8x32xf32>,
    return
  }
  func.func @transform_0(%arg0: i32) -> (i32, i32) {
    %c0_i32 = arith.constant 0 : i32
    %c0_i32_0 = arith.constant 0 : i32
    %c0_i32_1 = arith.constant 0 : i32
    return %c0_i32, %c0_i32_0 : i32, i32
  }
  func.func @transform_1(%arg0: i32) -> (i32, i32) {
    %c0_i32 = arith.constant 0 : i32
    %c0_i32_0 = arith.constant 0 : i32
    %c0_i32_1 = arith.constant 0 : i32
    return %c0_i32, %c0_i32_0 : i32, i32
  }
  func.func @transform_2(%arg0: i32) -> (i32, i32) {
    %c0_i32 = arith.constant 0 : i32
    %c0_i32_0 = arith.constant 0 : i32
    %c0_i32_1 = arith.constant 0 : i32
    return %c0_i32, %c0_i32_0 : i32, i32
  }
  func.func @transform_3(%arg0: i32) -> (i32, i32) {
    %c0_i32 = arith.constant 0 : i32
    %c0_i32_0 = arith.constant 0 : i32
    %c0_i32_1 = arith.constant 0 : i32
    return %c0_i32, %c0_i32_0 : i32, i32
  }
  func.func @transform_4(%arg0: i32) -> (i32, i32) {
    %c0_i32 = arith.constant 0 : i32
    %c0_i32_0 = arith.constant 0 : i32
    %c0_i32_1 = arith.constant 0 : i32
    return %c0_i32, %c0_i32_0 : i32, i32
  }
  func.func @transform_5(%arg0: i32) -> (i32, i32) {
    %c0_i32 = arith.constant 0 : i32
    %c0_i32_0 = arith.constant 0 : i32
    %c0_i32_1 = arith.constant 0 : i32
    return %c0_i32, %c0_i32_0 : i32, i32
  }
  func.func @transform_6(%arg0: i32) -> (i32, i32) {
    %c0_i32 = arith.constant 0 : i32
    %c0_i32_0 = arith.constant 0 : i32
    %c0_i32_1 = arith.constant 0 : i32
    return %c0_i32, %c0_i32_0 : i32, i32
  }
  func.func @transform_7(%arg0: i32) -> (i32, i32) {
    %c0_i32 = arith.constant 0 : i32
    %c0_i32_0 = arith.constant 0 : i32
    %c0_i32_1 = arith.constant 0 : i32
    return %c0_i32, %c0_i32_0 : i32, i32
  }
}

</mosaic_0001>

<llo_original>
// kernel: _lambda_.1
$region0: #{_lambda_.1}
  #allocation0 [shape = 'u32[]', space=smem, size = 0x4, offset = 0x4, fixed_abs, tag = 'smem constant byte address 0x4 - core index']
  #allocation1 [shape = 'u32[72,128]{1,0:T(1,128)}', space=vmem, size = 0x9000, scoped, tag = 'internal scratch']
  %s0 = inlined_call_operand.vmem [shape: f32[64,64], index: 0, kind: input, shape index: {}]
  %s1 = inlined_call_operand.vmem [shape: f32[64,128], index: 1, kind: input, shape index: {}]
  %s2 = inlined_call_operand.vmem [shape: f32[32,128], index: 2, kind: input, shape index: {}]
  %s3 = inlined_call_operand.vmem [shape: f32[1,128], index: 3, kind: input, shape index: {}]
  %s4 = inlined_call_operand.vmem [shape: f32[32,128], index: 4, kind: input, shape index: {}]
  %s5 = inlined_call_operand.vmem [shape: f32[32,128], index: 5, kind: input, shape index: {}]
  %s6 = inlined_call_operand.vmem [shape: f32[1,128], index: 6, kind: input, shape index: {}]
  %s7 = inlined_call_operand.vmem [shape: f32[8,32], index: 7, kind: output, shape index: {}]
  %s8 = sld [smem:[#allocation0]]
  $region38: #{_lambda_.1} parent=0
    _
  %s10 = ssub.s32 1, %s8
  %s11 = scalar_select 0, %s10, %s8
  // Predicated region
  $region2: #{_lambda_.1} parent=0 // pred_check
    _
  $region3: #{_lambda_.1} parent=0 // pred_check_branch
    %13 = sbr.rel (0) target = $region5
  $region4: #{_lambda_.1} parent=0 // pred_region
    _
  $region5: #{_lambda_.1} parent=0 // pred_fallthru
    _
  // Predicated region
  $region6: #{_lambda_.1} parent=0 // pred_check
    _
  $region7: #{_lambda_.1} parent=0 // pred_check_branch
    %15 = sbr.rel (0) target = $region9
  $region8: #{_lambda_.1} parent=0 // pred_region
    _
  $region9: #{_lambda_.1} parent=0 // pred_fallthru
    _
  // Predicated region
  $region10: #{_lambda_.1} parent=0 // pred_check
    _
  $region11: #{_lambda_.1} parent=0 // pred_check_branch
    %17 = sbr.rel (0) target = $region13
  $region12: #{_lambda_.1} parent=0 // pred_region
    _
  $region13: #{_lambda_.1} parent=0 // pred_fallthru
    _
  // Predicated region
  $region14: #{_lambda_.1} parent=0 // pred_check
    _
  $region15: #{_lambda_.1} parent=0 // pred_check_branch
    %19 = sbr.rel (0) target = $region17
  $region16: #{_lambda_.1} parent=0 // pred_region
    _
  $region17: #{_lambda_.1} parent=0 // pred_fallthru
    _
  // Predicated region
  $region18: #{_lambda_.1} parent=0 // pred_check
    _
  $region19: #{_lambda_.1} parent=0 // pred_check_branch
    %21 = sbr.rel (0) target = $region21
  $region20: #{_lambda_.1} parent=0 // pred_region
    _
  $region21: #{_lambda_.1} parent=0 // pred_fallthru
    _
  // Predicated region
  $region22: #{_lambda_.1} parent=0 // pred_check
    _
  $region23: #{_lambda_.1} parent=0 // pred_check_branch
    %23 = sbr.rel (0) target = $region25
  $region24: #{_lambda_.1} parent=0 // pred_region
    _
  $region25: #{_lambda_.1} parent=0 // pred_fallthru
    _
  // Predicated region
  $region26: #{_lambda_.1} parent=0 // pred_check
    _
  $region27: #{_lambda_.1} parent=0 // pred_check_branch
    %25 = sbr.rel (0) target = $region29
  $region28: #{_lambda_.1} parent=0 // pred_region
    _
  $region29: #{_lambda_.1} parent=0 // pred_fallthru
    _
  %v26 = vld [vmem:[%s0] sm:$0xff]
  %v27 = vld [vmem:[%s0 + $0x8] sm:$0xff]
  %v28 = vld [vmem:[%s0 + $0x10] sm:$0xff]
  %v29 = vld [vmem:[%s0 + $0x18] sm:$0xff]
  %v30 = vld [vmem:[%s0 + $0x20] sm:$0xff]
  %v31 = vld [vmem:[%s0 + $0x28] sm:$0xff]
  %v32 = vld [vmem:[%s0 + $0x30] sm:$0xff]
  %v33 = vld [vmem:[%s0 + $0x38] sm:$0xff]
  %v34 = vld [vmem:[%s1] sm:$0xff]
  %v35 = vld [vmem:[%s1 + $0x8] sm:$0xff]
  %v36 = vld [vmem:[%s1 + $0x10] sm:$0xff]
  %v37 = vld [vmem:[%s1 + $0x18] sm:$0xff]
  %v38 = vld [vmem:[%s1 + $0x20] sm:$0xff]
  %v39 = vld [vmem:[%s1 + $0x28] sm:$0xff]
  %v40 = vld [vmem:[%s1 + $0x30] sm:$0xff]
  %v41 = vld [vmem:[%s1 + $0x38] sm:$0xff]
  %v42 = vld [vmem:[%s3] sm:$0x1]
  %v44 = vperm.slane %v42, 0
  %vm46 = vcmask 523264
  %v48 = vsel %vm46, %v26, 0
  %v51 = vsel %vm46, %v27, 0
  %v54 = vsel %vm46, %v28, 0
  %v57 = vsel %vm46, %v29, 0
  %v60 = vsel %vm46, %v30, 0
  %v63 = vsel %vm46, %v31, 0
  %v66 = vsel %vm46, %v32, 0
  %v69 = vsel %vm46, %v33, 0
  %71 = vmatpush.msra.mxu0 0.0
  %72 = vmatpush.msra.mxu0 0.0
  %73 = vmatpush.msra.mxu0 0.0
  %74 = vmatpush.msra.mxu0 0.0
  %75 = vmatpush.msra.mxu0 0.0
  %76 = vmatpush.msra.mxu0 0.0
  %77 = vmatpush.msra.mxu0 0.0
  %78 = vmatpush.msra.mxu0 0.0
  %79 = vmatpush.msra.mxu0 %v41
  %80 = vmatpush.msra.mxu0 %v40
  %81 = vmatpush.msra.mxu0 %v39
  %82 = vmatpush.msra.mxu0 %v38
  %83 = vmatpush.msra.mxu0 %v37
  %84 = vmatpush.msra.mxu0 %v36
  %85 = vmatpush.msra.mxu0 %v35
  %86 = vmatpush.msra.mxu0 %v34
  %87 = vmatmul.f32.gmra.mxu0 %v48
  %v88 = vpop.f32.mrf.mxu0
  %v89 = vadd.f32 %v44, %v88
  %90 = vmatmul.f32.gmra.mxu0 %v51
  %v91 = vpop.f32.mrf.mxu0
  %v92 = vadd.f32 %v44, %v91
  %93 = vmatmul.f32.gmra.mxu0 %v54
  %v94 = vpop.f32.mrf.mxu0
  %v95 = vadd.f32 %v44, %v94
  %96 = vmatmul.f32.gmra.mxu0 %v57
  %v97 = vpop.f32.mrf.mxu0
  %v98 = vadd.f32 %v44, %v97
  %99 = vmatmul.f32.gmra.mxu0 %v60
  %v100 = vpop.f32.mrf.mxu0
  %v101 = vadd.f32 %v44, %v100
  %102 = vmatmul.f32.gmra.mxu0 %v63
  %v103 = vpop.f32.mrf.mxu0
  %v104 = vadd.f32 %v44, %v103
  %105 = vmatmul.f32.gmra.mxu0 %v66
  %v106 = vpop.f32.mrf.mxu0
  %v107 = vadd.f32 %v44, %v106
  %108 = vmatmul.f32.gmra.mxu0 %v69
  %v109 = vpop.f32.mrf.mxu0
  %v110 = vadd.f32 %v44, %v109
  %111 = vdwg.mxu0
  %v112 = vld [vmem:[%s2] sm:$0xff]
  %v113 = vld [vmem:[%s2 + $0x8] sm:$0xff]
  %v114 = vld [vmem:[%s2 + $0x10] sm:$0xff]
  %v115 = vld [vmem:[%s2 + $0x18] sm:$0xff]
  %vm116 = vcmask 261120
  %v118 = vsel %vm116, 0.0, 0
  %120 = vmatpush.msra.mxu0 0.0
  %121 = vmatpush.msra.mxu0 0.0
  %122 = vmatpush.msra.mxu0 0.0
  %123 = vmatpush.msra.mxu0 0.0
  %124 = vmatpush.msra.mxu0 0.0
  %125 = vmatpush.msra.mxu0 0.0
  %126 = vmatpush.msra.mxu0 0.0
  %127 = vmatpush.msra.mxu0 0.0
  %128 = vmatpush.msra.mxu0 0.0
  %129 = vmatpush.msra.mxu0 0.0
  %130 = vmatpush.msra.mxu0 0.0
  %131 = vmatpush.msra.mxu0 0.0
  %132 = vmatpush.msra.mxu0 %v115
  %133 = vmatpush.msra.mxu0 %v114
  %134 = vmatpush.msra.mxu0 %v113
  %135 = vmatpush.msra.mxu0 %v112
  %136 = vmatmul.f32.gmra.mxu0 %v118
  %v137 = vpop.f32.mrf.mxu0
  %v138 = vadd.f32 0.0, %v137
  %139 = vdwg.mxu0
  %v140 = vadd.f32 %v89, %v138
  %v141 = vxor.u32 %v140, 2147483648
  %v142 = vmul.f32 %v141, 1.442695
  %v143 = vpow.pop %v142
  %v144 = vadd.f32 %v143, 1.0
  %v145 = vrcp.pop %v144
  %v146 = vmul.f32 %v144, %v145
  %v147 = vsub.f32 1.0, %v146
  %v148 = vmul.f32 %v145, %v147
  %v149 = vadd.f32 %v145, %v148
  %vm150 = vweird.f32 %v144
  %vm151 = vweird.f32 %v145
  %vm152 = vmor %vm150, %vm151
  %v153 = vsel %vm152, %v145, %v149
  %v154 = vand.u32 2147483647, %v144
  %vm155 = vcmp.eq.f32.partialorder %v154, 8.507059e+37
  %v156 = vand.u32 %v144, 2147483648
  %v157 = vor.u32 1.1754944e-38, %v156
  %v158 = vsel %vm155, %v157, %v153
  %v159 = vmul.f32 1.0, %v158
  %v160 = vtanh.pop %v140
  %v161 = vmul.f32 %v159, 0.0
  %163 = vrot.lane.b32.xlu0 %v160, 64
  %v164 = vpop.permute.xlu0 %163
  %v166 = vmul.f32 %v159, %v164
  %168 = vrot.lane.b32.xlu0 %v166, 32
  %v169 = vpop.permute.xlu0 %168
  %v171 = vadd.f32 %v161, %v169
  %v172 = vtanh.pop %v171
  %174 = vrot.lane.b32.xlu0 %v172, 64
  %v175 = vpop.permute.xlu0 %174
  %v177 = vmul.f32 %v159, %v175
  %179 = vrot.lane.b32.xlu0 %v177, 32
  %v180 = vpop.permute.xlu0 %179
  %v181 = vsel %vm116, %v180, 0
  %183 = vmatpush.msra.mxu0 0.0
  %184 = vmatpush.msra.mxu0 0.0
  %185 = vmatpush.msra.mxu0 0.0
  %186 = vmatpush.msra.mxu0 0.0
  %187 = vmatpush.msra.mxu0 0.0
  %188 = vmatpush.msra.mxu0 0.0
  %189 = vmatpush.msra.mxu0 0.0
  %190 = vmatpush.msra.mxu0 0.0
  %191 = vmatpush.msra.mxu0 0.0
  %192 = vmatpush.msra.mxu0 0.0
  %193 = vmatpush.msra.mxu0 0.0
  %194 = vmatpush.msra.mxu0 0.0
  %195 = vmatpush.msra.mxu0 %v115
  %196 = vmatpush.msra.mxu0 %v114
  %197 = vmatpush.msra.mxu0 %v113
  %198 = vmatpush.msra.mxu0 %v112
  %199 = vmatmul.f32.gmra.mxu0 %v181
  %v200 = vpop.f32.mrf.mxu0
  %v201 = vadd.f32 0.0, %v200
  %202 = vdwg.mxu0
  %v203 = vadd.f32 %v92, %v201
  %v204 = vxor.u32 %v203, 2147483648
  %v205 = vmul.f32 %v204, 1.442695
  %v206 = vpow.pop %v205
  %v207 = vadd.f32 %v206, 1.0
  %v208 = vrcp.pop %v207
  %v209 = vmul.f32 %v207, %v208
  %v210 = vsub.f32 1.0, %v209
  %v211 = vmul.f32 %v208, %v210
  %v212 = vadd.f32 %v208, %v211
  %vm213 = vweird.f32 %v207
  %vm214 = vweird.f32 %v208
  %vm215 = vmor %vm213, %vm214
  %v216 = vsel %vm215, %v208, %v212
  %v217 = vand.u32 2147483647, %v207
  %vm218 = vcmp.eq.f32.partialorder %v217, 8.507059e+37
  %v219 = vand.u32 %v207, 2147483648
  %v220 = vor.u32 1.1754944e-38, %v219
  %v221 = vsel %vm218, %v220, %v216
  %v222 = vmul.f32 1.0, %v221
  %v223 = vtanh.pop %v203
  %v224 = vmul.f32 %v222, %v171
  %226 = vrot.lane.b32.xlu0 %v223, 64
  %v227 = vpop.permute.xlu0 %226
  %v229 = vmul.f32 %v222, %v227
  %231 = vrot.lane.b32.xlu0 %v229, 32
  %v232 = vpop.permute.xlu0 %231
  %v234 = vadd.f32 %v224, %v232
  %v235 = vtanh.pop %v234
  %237 = vrot.lane.b32.xlu0 %v235, 64
  %v238 = vpop.permute.xlu0 %237
  %v240 = vmul.f32 %v222, %v238
  %242 = vrot.lane.b32.xlu0 %v240, 32
  %v243 = vpop.permute.xlu0 %242
  %v244 = vsel %vm116, %v243, 0
  %246 = vmatpush.msra.mxu0 0.0
  %247 = vmatpush.msra.mxu0 0.0
  %248 = vmatpush.msra.mxu0 0.0
  %249 = vmatpush.msra.mxu0 0.0
  %250 = vmatpush.msra.mxu0 0.0
  %251 = vmatpush.msra.mxu0 0.0
  %252 = vmatpush.msra.mxu0 0.0
  %253 = vmatpush.msra.mxu0 0.0
  %254 = vmatpush.msra.mxu0 0.0
  %255 = vmatpush.msra.mxu0 0.0
  %256 = vmatpush.msra.mxu0 0.0
  %257 = vmatpush.msra.mxu0 0.0
  %258 = vmatpush.msra.mxu0 %v115
  %259 = vmatpush.msra.mxu0 %v114
  %260 = vmatpush.msra.mxu0 %v113
  %261 = vmatpush.msra.mxu0 %v112
  %262 = vmatmul.f32.gmra.mxu0 %v244
  %v263 = vpop.f32.mrf.mxu0
  %v264 = vadd.f32 0.0, %v263
  %265 = vdwg.mxu0
  %v266 = vadd.f32 %v95, %v264
  %v267 = vxor.u32 %v266, 2147483648
  %v268 = vmul.f32 %v267, 1.442695
  %v269 = vpow.pop %v268
  %v270 = vadd.f32 %v269, 1.0
  %v271 = vrcp.pop %v270
  %v272 = vmul.f32 %v270, %v271
  %v273 = vsub.f32 1.0, %v272
  %v274 = vmul.f32 %v271, %v273
  %v275 = vadd.f32 %v271, %v274
  %vm276 = vweird.f32 %v270
  %vm277 = vweird.f32 %v271
  %vm278 = vmor %vm276, %vm277
  %v279 = vsel %vm278, %v271, %v275
  %v280 = vand.u32 2147483647, %v270
  %vm281 = vcmp.eq.f32.partialorder %v280, 8.507059e+37
  %v282 = vand.u32 %v270, 2147483648
  %v283 = vor.u32 1.1754944e-38, %v282
  %v284 = vsel %vm281, %v283, %v279
  %v285 = vmul.f32 1.0, %v284
  %v286 = vtanh.pop %v266
  %v287 = vmul.f32 %v285, %v234
  %289 = vrot.lane.b32.xlu0 %v286, 64
  %v290 = vpop.permute.xlu0 %289
  %v292 = vmul.f32 %v285, %v290
  %294 = vrot.lane.b32.xlu0 %v292, 32
  %v295 = vpop.permute.xlu0 %294
  %v297 = vadd.f32 %v287, %v295
  %v298 = vtanh.pop %v297
  %300 = vrot.lane.b32.xlu0 %v298, 64
  %v301 = vpop.permute.xlu0 %300
  %v303 = vmul.f32 %v285, %v301
  %305 = vrot.lane.b32.xlu0 %v303, 32
  %v306 = vpop.permute.xlu0 %305
  %v307 = vsel %vm116, %v306, 0
  %309 = vmatpush.msra.mxu0 0.0
  %310 = vmatpush.msra.mxu0 0.0
  %311 = vmatpush.msra.mxu0 0.0
  %312 = vmatpush.msra.mxu0 0.0
  %313 = vmatpush.msra.mxu0 0.0
  %314 = vmatpush.msra.mxu0 0.0
  %315 = vmatpush.msra.mxu0 0.0
  %316 = vmatpush.msra.mxu0 0.0
  %317 = vmatpush.msra.mxu0 0.0
  %318 = vmatpush.msra.mxu0 0.0
  %319 = vmatpush.msra.mxu0 0.0
  %320 = vmatpush.msra.mxu0 0.0
  %321 = vmatpush.msra.mxu0 %v115
  %322 = vmatpush.msra.mxu0 %v114
  %323 = vmatpush.msra.mxu0 %v113
  %324 = vmatpush.msra.mxu0 %v112
  %325 = vmatmul.f32.gmra.mxu0 %v307
  %v326 = vpop.f32.mrf.mxu0
  %v327 = vadd.f32 0.0, %v326
  %328 = vdwg.mxu0
  %v329 = vadd.f32 %v98, %v327
  %v330 = vxor.u32 %v329, 2147483648
  %v331 = vmul.f32 %v330, 1.442695
  %v332 = vpow.pop %v331
  %v333 = vadd.f32 %v332, 1.0
  %v334 = vrcp.pop %v333
  %v335 = vmul.f32 %v333, %v334
  %v336 = vsub.f32 1.0, %v335
  %v337 = vmul.f32 %v334, %v336
  %v338 = vadd.f32 %v334, %v337
  %vm339 = vweird.f32 %v333
  %vm340 = vweird.f32 %v334
  %vm341 = vmor %vm339, %vm340
  %v342 = vsel %vm341, %v334, %v338
  %v343 = vand.u32 2147483647, %v333
  %vm344 = vcmp.eq.f32.partialorder %v343, 8.507059e+37
  %v345 = vand.u32 %v333, 2147483648
  %v346 = vor.u32 1.1754944e-38, %v345
  %v347 = vsel %vm344, %v346, %v342
  %v348 = vmul.f32 1.0, %v347
  %v349 = vtanh.pop %v329
  %v350 = vmul.f32 %v348, %v297
  %352 = vrot.lane.b32.xlu0 %v349, 64
  %v353 = vpop.permute.xlu0 %352
  %v355 = vmul.f32 %v348, %v353
  %357 = vrot.lane.b32.xlu0 %v355, 32
  %v358 = vpop.permute.xlu0 %357
  %v360 = vadd.f32 %v350, %v358
  %v361 = vtanh.pop %v360
  %363 = vrot.lane.b32.xlu0 %v361, 64
  %v364 = vpop.permute.xlu0 %363
  %v366 = vmul.f32 %v348, %v364
  %368 = vrot.lane.b32.xlu0 %v366, 32
  %v369 = vpop.permute.xlu0 %368
  %v370 = vsel %vm116, %v369, 0
  %372 = vmatpush.msra.mxu0 0.0
  %373 = vmatpush.msra.mxu0 0.0
  %374 = vmatpush.msra.mxu0 0.0
  %375 = vmatpush.msra.mxu0 0.0
  %376 = vmatpush.msra.mxu0 0.0
  %377 = vmatpush.msra.mxu0 0.0
  %378 = vmatpush.msra.mxu0 0.0
  %379 = vmatpush.msra.mxu0 0.0
  %380 = vmatpush.msra.mxu0 0.0
  %381 = vmatpush.msra.mxu0 0.0
  %382 = vmatpush.msra.mxu0 0.0
  %383 = vmatpush.msra.mxu0 0.0
  %384 = vmatpush.msra.mxu0 %v115
  %385 = vmatpush.msra.mxu0 %v114
  %386 = vmatpush.msra.mxu0 %v113
  %387 = vmatpush.msra.mxu0 %v112
  %388 = vmatmul.f32.gmra.mxu0 %v370
  %v389 = vpop.f32.mrf.mxu0
  %v390 = vadd.f32 0.0, %v389
  %391 = vdwg.mxu0
  %v392 = vadd.f32 %v101, %v390
  %v393 = vxor.u32 %v392, 2147483648
  %v394 = vmul.f32 %v393, 1.442695
  %v395 = vpow.pop %v394
  %v396 = vadd.f32 %v395, 1.0
  %v397 = vrcp.pop %v396
  %v398 = vmul.f32 %v396, %v397
  %v399 = vsub.f32 1.0, %v398
  %v400 = vmul.f32 %v397, %v399
  %v401 = vadd.f32 %v397, %v400
  %vm402 = vweird.f32 %v396
  %vm403 = vweird.f32 %v397
  %vm404 = vmor %vm402, %vm403
  %v405 = vsel %vm404, %v397, %v401
  %v406 = vand.u32 2147483647, %v396
  %vm407 = vcmp.eq.f32.partialorder %v406, 8.507059e+37
  %v408 = vand.u32 %v396, 2147483648
  %v409 = vor.u32 1.1754944e-38, %v408
  %v410 = vsel %vm407, %v409, %v405
  %v411 = vmul.f32 1.0, %v410
  %v412 = vtanh.pop %v392
  %v413 = vmul.f32 %v411, %v360
  %415 = vrot.lane.b32.xlu0 %v412, 64
  %v416 = vpop.permute.xlu0 %415
  %v418 = vmul.f32 %v411, %v416
  %420 = vrot.lane.b32.xlu0 %v418, 32
  %v421 = vpop.permute.xlu0 %420
  %v423 = vadd.f32 %v413, %v421
  %v424 = vtanh.pop %v423
  %426 = vrot.lane.b32.xlu0 %v424, 64
  %v427 = vpop.permute.xlu0 %426
  %v429 = vmul.f32 %v411, %v427
  %431 = vrot.lane.b32.xlu0 %v429, 32
  %v432 = vpop.permute.xlu0 %431
  %v433 = vsel %vm116, %v432, 0
  %435 = vmatpush.msra.mxu0 0.0
  %436 = vmatpush.msra.mxu0 0.0
  %437 = vmatpush.msra.mxu0 0.0
  %438 = vmatpush.msra.mxu0 0.0
  %439 = vmatpush.msra.mxu0 0.0
  %440 = vmatpush.msra.mxu0 0.0
  %441 = vmatpush.msra.mxu0 0.0
  %442 = vmatpush.msra.mxu0 0.0
  %443 = vmatpush.msra.mxu0 0.0
  %444 = vmatpush.msra.mxu0 0.0
  %445 = vmatpush.msra.mxu0 0.0
  %446 = vmatpush.msra.mxu0 0.0
  %447 = vmatpush.msra.mxu0 %v115
  %448 = vmatpush.msra.mxu0 %v114
  %449 = vmatpush.msra.mxu0 %v113
  %450 = vmatpush.msra.mxu0 %v112
  %451 = vmatmul.f32.gmra.mxu0 %v433
  %v452 = vpop.f32.mrf.mxu0
  %v453 = vadd.f32 0.0, %v452
  %454 = vdwg.mxu0
  %v455 = vadd.f32 %v104, %v453
  %v456 = vxor.u32 %v455, 2147483648
  %v457 = vmul.f32 %v456, 1.442695
  %v458 = vpow.pop %v457
  %v459 = vadd.f32 %v458, 1.0
  %v460 = vrcp.pop %v459
  %v461 = vmul.f32 %v459, %v460
  %v462 = vsub.f32 1.0, %v461
  %v463 = vmul.f32 %v460, %v462
  %v464 = vadd.f32 %v460, %v463
  %vm465 = vweird.f32 %v459
  %vm466 = vweird.f32 %v460
  %vm467 = vmor %vm465, %vm466
  %v468 = vsel %vm467, %v460, %v464
  %v469 = vand.u32 2147483647, %v459
  %vm470 = vcmp.eq.f32.partialorder %v469, 8.507059e+37
  %v471 = vand.u32 %v459, 2147483648
  %v472 = vor.u32 1.1754944e-38, %v471
  %v473 = vsel %vm470, %v472, %v468
  %v474 = vmul.f32 1.0, %v473
  %v475 = vtanh.pop %v455
  %v476 = vmul.f32 %v474, %v423
  %478 = vrot.lane.b32.xlu0 %v475, 64
  %v479 = vpop.permute.xlu0 %478
  %v481 = vmul.f32 %v474, %v479
  %483 = vrot.lane.b32.xlu0 %v481, 32
  %v484 = vpop.permute.xlu0 %483
  %v486 = vadd.f32 %v476, %v484
  %v487 = vtanh.pop %v486
  %489 = vrot.lane.b32.xlu0 %v487, 64
  %v490 = vpop.permute.xlu0 %489
  %v492 = vmul.f32 %v474, %v490
  %494 = vrot.lane.b32.xlu0 %v492, 32
  %v495 = vpop.permute.xlu0 %494
  %v496 = vsel %vm116, %v495, 0
  %498 = vmatpush.msra.mxu0 0.0
  %499 = vmatpush.msra.mxu0 0.0
  %500 = vmatpush.msra.mxu0 0.0
  %501 = vmatpush.msra.mxu0 0.0
  %502 = vmatpush.msra.mxu0 0.0
  %503 = vmatpush.msra.mxu0 0.0
  %504 = vmatpush.msra.mxu0 0.0
  %505 = vmatpush.msra.mxu0 0.0
  %506 = vmatpush.msra.mxu0 0.0
  %507 = vmatpush.msra.mxu0 0.0
  %508 = vmatpush.msra.mxu0 0.0
  %509 = vmatpush.msra.mxu0 0.0
  %510 = vmatpush.msra.mxu0 %v115
  %511 = vmatpush.msra.mxu0 %v114
  %512 = vmatpush.msra.mxu0 %v113
  %513 = vmatpush.msra.mxu0 %v112
  %514 = vmatmul.f32.gmra.mxu0 %v496
  %v515 = vpop.f32.mrf.mxu0
  %v516 = vadd.f32 0.0, %v515
  %517 = vdwg.mxu0
  %v518 = vadd.f32 %v107, %v516
  %v519 = vxor.u32 %v518, 2147483648
  %v520 = vmul.f32 %v519, 1.442695
  %v521 = vpow.pop %v520
  %v522 = vadd.f32 %v521, 1.0
  %v523 = vrcp.pop %v522
  %v524 = vmul.f32 %v522, %v523
  %v525 = vsub.f32 1.0, %v524
  %v526 = vmul.f32 %v523, %v525
  %v527 = vadd.f32 %v523, %v526
  %vm528 = vweird.f32 %v522
  %vm529 = vweird.f32 %v523
  %vm530 = vmor %vm528, %vm529
  %v531 = vsel %vm530, %v523, %v527
  %v532 = vand.u32 2147483647, %v522
  %vm533 = vcmp.eq.f32.partialorder %v532, 8.507059e+37
  %v534 = vand.u32 %v522, 2147483648
  %v535 = vor.u32 1.1754944e-38, %v534
  %v536 = vsel %vm533, %v535, %v531
  %v537 = vmul.f32 1.0, %v536
  %v538 = vtanh.pop %v518
  %v539 = vmul.f32 %v537, %v486
  %541 = vrot.lane.b32.xlu0 %v538, 64
  %v542 = vpop.permute.xlu0 %541
  %v544 = vmul.f32 %v537, %v542
  %546 = vrot.lane.b32.xlu0 %v544, 32
  %v547 = vpop.permute.xlu0 %546
  %v549 = vadd.f32 %v539, %v547
  %v550 = vtanh.pop %v549
  %552 = vrot.lane.b32.xlu0 %v550, 64
  %v553 = vpop.permute.xlu0 %552
  %v555 = vmul.f32 %v537, %v553
  %557 = vrot.lane.b32.xlu0 %v555, 32
  %v558 = vpop.permute.xlu0 %557
  %v559 = vsel %vm116, %v558, 0
  %561 = vmatpush.msra.mxu0 0.0
  %562 = vmatpush.msra.mxu0 0.0
  %563 = vmatpush.msra.mxu0 0.0
  %564 = vmatpush.msra.mxu0 0.0
  %565 = vmatpush.msra.mxu0 0.0
  %566 = vmatpush.msra.mxu0 0.0
  %567 = vmatpush.msra.mxu0 0.0
  %568 = vmatpush.msra.mxu0 0.0
  %569 = vmatpush.msra.mxu0 0.0
  %570 = vmatpush.msra.mxu0 0.0
  %571 = vmatpush.msra.mxu0 0.0
  %572 = vmatpush.msra.mxu0 0.0
  %573 = vmatpush.msra.mxu0 %v115
  %574 = vmatpush.msra.mxu0 %v114
  %575 = vmatpush.msra.mxu0 %v113
  %576 = vmatpush.msra.mxu0 %v112
  %577 = vmatmul.f32.gmra.mxu0 %v559
  %v578 = vpop.f32.mrf.mxu0
  %v579 = vadd.f32 0.0, %v578
  %580 = vdwg.mxu0
  %v581 = vadd.f32 %v110, %v579
  %v582 = vxor.u32 %v581, 2147483648
  %v583 = vmul.f32 %v582, 1.442695
  %v584 = vpow.pop %v583
  %v585 = vadd.f32 %v584, 1.0
  %v586 = vrcp.pop %v585
  %v587 = vmul.f32 %v585, %v586
  %v588 = vsub.f32 1.0, %v587
  %v589 = vmul.f32 %v586, %v588
  %v590 = vadd.f32 %v586, %v589
  %vm591 = vweird.f32 %v585
  %vm592 = vweird.f32 %v586
  %vm593 = vmor %vm591, %vm592
  %v594 = vsel %vm593, %v586, %v590
  %v595 = vand.u32 2147483647, %v585
  %vm596 = vcmp.eq.f32.partialorder %v595, 8.507059e+37
  %v597 = vand.u32 %v585, 2147483648
  %v598 = vor.u32 1.1754944e-38, %v597
  %v599 = vsel %vm596, %v598, %v594
  %v600 = vmul.f32 1.0, %v599
  %v601 = vtanh.pop %v581
  %v602 = vmul.f32 %v600, %v549
  %604 = vrot.lane.b32.xlu0 %v601, 64
  %v605 = vpop.permute.xlu0 %604
  %v607 = vmul.f32 %v600, %v605
  %609 = vrot.lane.b32.xlu0 %v607, 32
  %v610 = vpop.permute.xlu0 %609
  %v612 = vadd.f32 %v602, %v610
  %v613 = vtanh.pop %v612
  %615 = vrot.lane.b32.xlu0 %v613, 64
  %v616 = vpop.permute.xlu0 %615
  %v618 = vmul.f32 %v600, %v616
  %v619 = vld [vmem:[%s4] sm:$0xff]
  %v620 = vld [vmem:[%s4 + $0x8] sm:$0xff]
  %v621 = vld [vmem:[%s4 + $0x10] sm:$0xff]
  %v622 = vld [vmem:[%s4 + $0x18] sm:$0xff]
  %v623 = vld [vmem:[%s6] sm:$0x1]
  %v625 = vperm.slane %v623, 0
  %628 = vrot.lane.b32.xlu0 %v618, 32
  %v629 = vpop.permute.xlu0 %628
  %v630 = vsel %vm116, %v629, 0
  %632 = vmatpush.msra.mxu0 0.0
  %633 = vmatpush.msra.mxu0 0.0
  %634 = vmatpush.msra.mxu0 0.0
  %635 = vmatpush.msra.mxu0 0.0
  %636 = vmatpush.msra.mxu0 0.0
  %637 = vmatpush.msra.mxu0 0.0
  %638 = vmatpush.msra.mxu0 0.0
  %639 = vmatpush.msra.mxu0 0.0
  %640 = vmatpush.msra.mxu0 0.0
  %641 = vmatpush.msra.mxu0 0.0
  %642 = vmatpush.msra.mxu0 0.0
  %643 = vmatpush.msra.mxu0 0.0
  %644 = vmatpush.msra.mxu0 %v622
  %645 = vmatpush.msra.mxu0 %v621
  %646 = vmatpush.msra.mxu0 %v620
  %647 = vmatpush.msra.mxu0 %v619
  %648 = vmatmul.f32.gmra.mxu0 %v181
  %v649 = vpop.f32.mrf.mxu0
  %v650 = vadd.f32 %v625, %v649
  %651 = vmatmul.f32.gmra.mxu0 %v244
  %v652 = vpop.f32.mrf.mxu0
  %v653 = vadd.f32 %v625, %v652
  %654 = vmatmul.f32.gmra.mxu0 %v307
  %v655 = vpop.f32.mrf.mxu0
  %v656 = vadd.f32 %v625, %v655
  %657 = vmatmul.f32.gmra.mxu0 %v370
  %v658 = vpop.f32.mrf.mxu0
  %v659 = vadd.f32 %v625, %v658
  %660 = vmatmul.f32.gmra.mxu0 %v433
  %v661 = vpop.f32.mrf.mxu0
  %v662 = vadd.f32 %v625, %v661
  %663 = vmatmul.f32.gmra.mxu0 %v496
  %v664 = vpop.f32.mrf.mxu0
  %v665 = vadd.f32 %v625, %v664
  %666 = vmatmul.f32.gmra.mxu0 %v559
  %v667 = vpop.f32.mrf.mxu0
  %v668 = vadd.f32 %v625, %v667
  %669 = vmatmul.f32.gmra.mxu0 %v630
  %v670 = vpop.f32.mrf.mxu0
  %v671 = vadd.f32 %v625, %v670
  %672 = vdwg.mxu0
  %v673 = vld [vmem:[%s5] sm:$0xff]
  %v674 = vld [vmem:[%s5 + $0x8] sm:$0xff]
  %v675 = vld [vmem:[%s5 + $0x10] sm:$0xff]
  %v676 = vld [vmem:[%s5 + $0x18] sm:$0xff]
  %677 = vmatpush.msra.mxu0 0.0
  %678 = vmatpush.msra.mxu0 0.0
  %679 = vmatpush.msra.mxu0 0.0
  %680 = vmatpush.msra.mxu0 0.0
  %681 = vmatpush.msra.mxu0 0.0
  %682 = vmatpush.msra.mxu0 0.0
  %683 = vmatpush.msra.mxu0 0.0
  %684 = vmatpush.msra.mxu0 0.0
  %685 = vmatpush.msra.mxu0 0.0
  %686 = vmatpush.msra.mxu0 0.0
  %687 = vmatpush.msra.mxu0 0.0
  %688 = vmatpush.msra.mxu0 0.0
  %689 = vmatpush.msra.mxu0 %v676
  %690 = vmatpush.msra.mxu0 %v675
  %691 = vmatpush.msra.mxu0 %v674
  %692 = vmatpush.msra.mxu0 %v673
  %693 = vmatmul.f32.gmra.mxu0 %v118
  %v694 = vpop.f32.mrf.mxu0
  %v695 = vadd.f32 0.0, %v694
  %696 = vdwg.mxu0
  %v697 = vadd.f32 %v650, %v695
  %v698 = vxor.u32 %v697, 2147483648
  %v699 = vmul.f32 %v698, 1.442695
  %v700 = vpow.pop %v699
  %v701 = vadd.f32 %v700, 1.0
  %v702 = vrcp.pop %v701
  %v703 = vmul.f32 %v701, %v702
  %v704 = vsub.f32 1.0, %v703
  %v705 = vmul.f32 %v702, %v704
  %v706 = vadd.f32 %v702, %v705
  %vm707 = vweird.f32 %v701
  %vm708 = vweird.f32 %v702
  %vm709 = vmor %vm707, %vm708
  %v710 = vsel %vm709, %v702, %v706
  %v711 = vand.u32 2147483647, %v701
  %vm712 = vcmp.eq.f32.partialorder %v711, 8.507059e+37
  %v713 = vand.u32 %v701, 2147483648
  %v714 = vor.u32 1.1754944e-38, %v713
  %v715 = vsel %vm712, %v714, %v710
  %v716 = vmul.f32 1.0, %v715
  %v717 = vtanh.pop %v697
  %v718 = vmul.f32 %v716, 0.0
  %720 = vrot.lane.b32.xlu0 %v717, 64
  %v721 = vpop.permute.xlu0 %720
  %v723 = vmul.f32 %v716, %v721
  %725 = vrot.lane.b32.xlu0 %v723, 32
  %v726 = vpop.permute.xlu0 %725
  %v728 = vadd.f32 %v718, %v726
  %v729 = vtanh.pop %v728
  %731 = vrot.lane.b32.xlu0 %v729, 64
  %v732 = vpop.permute.xlu0 %731
  %v734 = vmul.f32 %v716, %v732
  %736 = vrot.lane.b32.xlu0 %v734, 32
  %v737 = vpop.permute.xlu0 %736
  %v738 = vsel %vm116, %v737, 0
  %740 = vmatpush.msra.mxu0 0.0
  %741 = vmatpush.msra.mxu0 0.0
  %742 = vmatpush.msra.mxu0 0.0
  %743 = vmatpush.msra.mxu0 0.0
  %744 = vmatpush.msra.mxu0 0.0
  %745 = vmatpush.msra.mxu0 0.0
  %746 = vmatpush.msra.mxu0 0.0
  %747 = vmatpush.msra.mxu0 0.0
  %748 = vmatpush.msra.mxu0 0.0
  %749 = vmatpush.msra.mxu0 0.0
  %750 = vmatpush.msra.mxu0 0.0
  %751 = vmatpush.msra.mxu0 0.0
  %752 = vmatpush.msra.mxu0 %v676
  %753 = vmatpush.msra.mxu0 %v675
  %754 = vmatpush.msra.mxu0 %v674
  %755 = vmatpush.msra.mxu0 %v673
  %756 = vmatmul.f32.gmra.mxu0 %v738
  %v757 = vpop.f32.mrf.mxu0
  %v758 = vadd.f32 0.0, %v757
  %759 = vdwg.mxu0
  %v760 = vadd.f32 %v653, %v758
  %v761 = vxor.u32 %v760, 2147483648
  %v762 = vmul.f32 %v761, 1.442695
  %v763 = vpow.pop %v762
  %v764 = vadd.f32 %v763, 1.0
  %v765 = vrcp.pop %v764
  %v766 = vmul.f32 %v764, %v765
  %v767 = vsub.f32 1.0, %v766
  %v768 = vmul.f32 %v765, %v767
  %v769 = vadd.f32 %v765, %v768
  %vm770 = vweird.f32 %v764
  %vm771 = vweird.f32 %v765
  %vm772 = vmor %vm770, %vm771
  %v773 = vsel %vm772, %v765, %v769
  %v774 = vand.u32 2147483647, %v764
  %vm775 = vcmp.eq.f32.partialorder %v774, 8.507059e+37
  %v776 = vand.u32 %v764, 2147483648
  %v777 = vor.u32 1.1754944e-38, %v776
  %v778 = vsel %vm775, %v777, %v773
  %v779 = vmul.f32 1.0, %v778
  %v780 = vtanh.pop %v760
  %v781 = vmul.f32 %v779, %v728
  %783 = vrot.lane.b32.xlu0 %v780, 64
  %v784 = vpop.permute.xlu0 %783
  %v786 = vmul.f32 %v779, %v784
  %788 = vrot.lane.b32.xlu0 %v786, 32
  %v789 = vpop.permute.xlu0 %788
  %v791 = vadd.f32 %v781, %v789
  %v792 = vtanh.pop %v791
  %794 = vrot.lane.b32.xlu0 %v792, 64
  %v795 = vpop.permute.xlu0 %794
  %v797 = vmul.f32 %v779, %v795
  %799 = vrot.lane.b32.xlu0 %v797, 32
  %v800 = vpop.permute.xlu0 %799
  %v801 = vsel %vm116, %v800, 0
  %803 = vmatpush.msra.mxu0 0.0
  %804 = vmatpush.msra.mxu0 0.0
  %805 = vmatpush.msra.mxu0 0.0
  %806 = vmatpush.msra.mxu0 0.0
  %807 = vmatpush.msra.mxu0 0.0
  %808 = vmatpush.msra.mxu0 0.0
  %809 = vmatpush.msra.mxu0 0.0
  %810 = vmatpush.msra.mxu0 0.0
  %811 = vmatpush.msra.mxu0 0.0
  %812 = vmatpush.msra.mxu0 0.0
  %813 = vmatpush.msra.mxu0 0.0
  %814 = vmatpush.msra.mxu0 0.0
  %815 = vmatpush.msra.mxu0 %v676
  %816 = vmatpush.msra.mxu0 %v675
  %817 = vmatpush.msra.mxu0 %v674
  %818 = vmatpush.msra.mxu0 %v673
  %819 = vmatmul.f32.gmra.mxu0 %v801
  %v820 = vpop.f32.mrf.mxu0
  %v821 = vadd.f32 0.0, %v820
  %822 = vdwg.mxu0
  %v823 = vadd.f32 %v656, %v821
  %v824 = vxor.u32 %v823, 2147483648
  %v825 = vmul.f32 %v824, 1.442695
  %v826 = vpow.pop %v825
  %v827 = vadd.f32 %v826, 1.0
  %v828 = vrcp.pop %v827
  %v829 = vmul.f32 %v827, %v828
  %v830 = vsub.f32 1.0, %v829
  %v831 = vmul.f32 %v828, %v830
  %v832 = vadd.f32 %v828, %v831
  %vm833 = vweird.f32 %v827
  %vm834 = vweird.f32 %v828
  %vm835 = vmor %vm833, %vm834
  %v836 = vsel %vm835, %v828, %v832
  %v837 = vand.u32 2147483647, %v827
  %vm838 = vcmp.eq.f32.partialorder %v837, 8.507059e+37
  %v839 = vand.u32 %v827, 2147483648
  %v840 = vor.u32 1.1754944e-38, %v839
  %v841 = vsel %vm838, %v840, %v836
  %v842 = vmul.f32 1.0, %v841
  %v843 = vtanh.pop %v823
  %v844 = vmul.f32 %v842, %v791
  %846 = vrot.lane.b32.xlu0 %v843, 64
  %v847 = vpop.permute.xlu0 %846
  %v849 = vmul.f32 %v842, %v847
  %851 = vrot.lane.b32.xlu0 %v849, 32
  %v852 = vpop.permute.xlu0 %851
  %v854 = vadd.f32 %v844, %v852
  %v855 = vtanh.pop %v854
  %857 = vrot.lane.b32.xlu0 %v855, 64
  %v858 = vpop.permute.xlu0 %857
  %v860 = vmul.f32 %v842, %v858
  %862 = vrot.lane.b32.xlu0 %v860, 32
  %v863 = vpop.permute.xlu0 %862
  %v864 = vsel %vm116, %v863, 0
  %866 = vmatpush.msra.mxu0 0.0
  %867 = vmatpush.msra.mxu0 0.0
  %868 = vmatpush.msra.mxu0 0.0
  %869 = vmatpush.msra.mxu0 0.0
  %870 = vmatpush.msra.mxu0 0.0
  %871 = vmatpush.msra.mxu0 0.0
  %872 = vmatpush.msra.mxu0 0.0
  %873 = vmatpush.msra.mxu0 0.0
  %874 = vmatpush.msra.mxu0 0.0
  %875 = vmatpush.msra.mxu0 0.0
  %876 = vmatpush.msra.mxu0 0.0
  %877 = vmatpush.msra.mxu0 0.0
  %878 = vmatpush.msra.mxu0 %v676
  %879 = vmatpush.msra.mxu0 %v675
  %880 = vmatpush.msra.mxu0 %v674
  %881 = vmatpush.msra.mxu0 %v673
  %882 = vmatmul.f32.gmra.mxu0 %v864
  %v883 = vpop.f32.mrf.mxu0
  %v884 = vadd.f32 0.0, %v883
  %885 = vdwg.mxu0
  %v886 = vadd.f32 %v659, %v884
  %v887 = vxor.u32 %v886, 2147483648
  %v888 = vmul.f32 %v887, 1.442695
  %v889 = vpow.pop %v888
  %v890 = vadd.f32 %v889, 1.0
  %v891 = vrcp.pop %v890
  %v892 = vmul.f32 %v890, %v891
  %v893 = vsub.f32 1.0, %v892
  %v894 = vmul.f32 %v891, %v893
  %v895 = vadd.f32 %v891, %v894
  %vm896 = vweird.f32 %v890
  %vm897 = vweird.f32 %v891
  %vm898 = vmor %vm896, %vm897
  %v899 = vsel %vm898, %v891, %v895
  %v900 = vand.u32 2147483647, %v890
  %vm901 = vcmp.eq.f32.partialorder %v900, 8.507059e+37
  %v902 = vand.u32 %v890, 2147483648
  %v903 = vor.u32 1.1754944e-38, %v902
  %v904 = vsel %vm901, %v903, %v899
  %v905 = vmul.f32 1.0, %v904
  %v906 = vtanh.pop %v886
  %v907 = vmul.f32 %v905, %v854
  %909 = vrot.lane.b32.xlu0 %v906, 64
  %v910 = vpop.permute.xlu0 %909
  %v912 = vmul.f32 %v905, %v910
  %914 = vrot.lane.b32.xlu0 %v912, 32
  %v915 = vpop.permute.xlu0 %914
  %v917 = vadd.f32 %v907, %v915
  %v918 = vtanh.pop %v917
  %920 = vrot.lane.b32.xlu0 %v918, 64
  %v921 = vpop.permute.xlu0 %920
  %v923 = vmul.f32 %v905, %v921
  %925 = vrot.lane.b32.xlu0 %v923, 32
  %v926 = vpop.permute.xlu0 %925
  %v927 = vsel %vm116, %v926, 0
  %929 = vmatpush.msra.mxu0 0.0
  %930 = vmatpush.msra.mxu0 0.0
  %931 = vmatpush.msra.mxu0 0.0
  %932 = vmatpush.msra.mxu0 0.0
  %933 = vmatpush.msra.mxu0 0.0
  %934 = vmatpush.msra.mxu0 0.0
  %935 = vmatpush.msra.mxu0 0.0
  %936 = vmatpush.msra.mxu0 0.0
  %937 = vmatpush.msra.mxu0 0.0
  %938 = vmatpush.msra.mxu0 0.0
  %939 = vmatpush.msra.mxu0 0.0
  %940 = vmatpush.msra.mxu0 0.0
  %941 = vmatpush.msra.mxu0 %v676
  %942 = vmatpush.msra.mxu0 %v675
  %943 = vmatpush.msra.mxu0 %v674
  %944 = vmatpush.msra.mxu0 %v673
  %945 = vmatmul.f32.gmra.mxu0 %v927
  %v946 = vpop.f32.mrf.mxu0
  %v947 = vadd.f32 0.0, %v946
  %948 = vdwg.mxu0
  %v949 = vadd.f32 %v662, %v947
  %v950 = vxor.u32 %v949, 2147483648
  %v951 = vmul.f32 %v950, 1.442695
  %v952 = vpow.pop %v951
  %v953 = vadd.f32 %v952, 1.0
  %v954 = vrcp.pop %v953
  %v955 = vmul.f32 %v953, %v954
  %v956 = vsub.f32 1.0, %v955
  %v957 = vmul.f32 %v954, %v956
  %v958 = vadd.f32 %v954, %v957
  %vm959 = vweird.f32 %v953
  %vm960 = vweird.f32 %v954
  %vm961 = vmor %vm959, %vm960
  %v962 = vsel %vm961, %v954, %v958
  %v963 = vand.u32 2147483647, %v953
  %vm964 = vcmp.eq.f32.partialorder %v963, 8.507059e+37
  %v965 = vand.u32 %v953, 2147483648
  %v966 = vor.u32 1.1754944e-38, %v965
  %v967 = vsel %vm964, %v966, %v962
  %v968 = vmul.f32 1.0, %v967
  %v969 = vtanh.pop %v949
  %v970 = vmul.f32 %v968, %v917
  %972 = vrot.lane.b32.xlu0 %v969, 64
  %v973 = vpop.permute.xlu0 %972
  %v975 = vmul.f32 %v968, %v973
  %977 = vrot.lane.b32.xlu0 %v975, 32
  %v978 = vpop.permute.xlu0 %977
  %v980 = vadd.f32 %v970, %v978
  %v981 = vtanh.pop %v980
  %983 = vrot.lane.b32.xlu0 %v981, 64
  %v984 = vpop.permute.xlu0 %983
  %v986 = vmul.f32 %v968, %v984
  %988 = vrot.lane.b32.xlu0 %v986, 32
  %v989 = vpop.permute.xlu0 %988
  %v990 = vsel %vm116, %v989, 0
  %992 = vmatpush.msra.mxu0 0.0
  %993 = vmatpush.msra.mxu0 0.0
  %994 = vmatpush.msra.mxu0 0.0
  %995 = vmatpush.msra.mxu0 0.0
  %996 = vmatpush.msra.mxu0 0.0
  %997 = vmatpush.msra.mxu0 0.0
  %998 = vmatpush.msra.mxu0 0.0
  %999 = vmatpush.msra.mxu0 0.0
  %1000 = vmatpush.msra.mxu0 0.0
  %1001 = vmatpush.msra.mxu0 0.0
  %1002 = vmatpush.msra.mxu0 0.0
  %1003 = vmatpush.msra.mxu0 0.0
  %1004 = vmatpush.msra.mxu0 %v676
  %1005 = vmatpush.msra.mxu0 %v675
  %1006 = vmatpush.msra.mxu0 %v674
  %1007 = vmatpush.msra.mxu0 %v673
  %1008 = vmatmul.f32.gmra.mxu0 %v990
  %v1009 = vpop.f32.mrf.mxu0
  %v1010 = vadd.f32 0.0, %v1009
  %1011 = vdwg.mxu0
  %v1012 = vadd.f32 %v665, %v1010
  %v1013 = vxor.u32 %v1012, 2147483648
  %v1014 = vmul.f32 %v1013, 1.442695
  %v1015 = vpow.pop %v1014
  %v1016 = vadd.f32 %v1015, 1.0
  %v1017 = vrcp.pop %v1016
  %v1018 = vmul.f32 %v1016, %v1017
  %v1019 = vsub.f32 1.0, %v1018
  %v1020 = vmul.f32 %v1017, %v1019
  %v1021 = vadd.f32 %v1017, %v1020
  %vm1022 = vweird.f32 %v1016
  %vm1023 = vweird.f32 %v1017
  %vm1024 = vmor %vm1022, %vm1023
  %v1025 = vsel %vm1024, %v1017, %v1021
  %v1026 = vand.u32 2147483647, %v1016
  %vm1027 = vcmp.eq.f32.partialorder %v1026, 8.507059e+37
  %v1028 = vand.u32 %v1016, 2147483648
  %v1029 = vor.u32 1.1754944e-38, %v1028
  %v1030 = vsel %vm1027, %v1029, %v1025
  %v1031 = vmul.f32 1.0, %v1030
  %v1032 = vtanh.pop %v1012
  %v1033 = vmul.f32 %v1031, %v980
  %1035 = vrot.lane.b32.xlu0 %v1032, 64
  %v1036 = vpop.permute.xlu0 %1035
  %v1038 = vmul.f32 %v1031, %v1036
  %1040 = vrot.lane.b32.xlu0 %v1038, 32
  %v1041 = vpop.permute.xlu0 %1040
  %v1043 = vadd.f32 %v1033, %v1041
  %v1044 = vtanh.pop %v1043
  %1046 = vrot.lane.b32.xlu0 %v1044, 64
  %v1047 = vpop.permute.xlu0 %1046
  %v1049 = vmul.f32 %v1031, %v1047
  %1051 = vrot.lane.b32.xlu0 %v1049, 32
  %v1052 = vpop.permute.xlu0 %1051
  %v1053 = vsel %vm116, %v1052, 0
  %1055 = vmatpush.msra.mxu0 0.0
  %1056 = vmatpush.msra.mxu0 0.0
  %1057 = vmatpush.msra.mxu0 0.0
  %1058 = vmatpush.msra.mxu0 0.0
  %1059 = vmatpush.msra.mxu0 0.0
  %1060 = vmatpush.msra.mxu0 0.0
  %1061 = vmatpush.msra.mxu0 0.0
  %1062 = vmatpush.msra.mxu0 0.0
  %1063 = vmatpush.msra.mxu0 0.0
  %1064 = vmatpush.msra.mxu0 0.0
  %1065 = vmatpush.msra.mxu0 0.0
  %1066 = vmatpush.msra.mxu0 0.0
  %1067 = vmatpush.msra.mxu0 %v676
  %1068 = vmatpush.msra.mxu0 %v675
  %1069 = vmatpush.msra.mxu0 %v674
  %1070 = vmatpush.msra.mxu0 %v673
  %1071 = vmatmul.f32.gmra.mxu0 %v1053
  %v1072 = vpop.f32.mrf.mxu0
  %v1073 = vadd.f32 0.0, %v1072
  %1074 = vdwg.mxu0
  %v1075 = vadd.f32 %v668, %v1073
  %v1076 = vxor.u32 %v1075, 2147483648
  %v1077 = vmul.f32 %v1076, 1.442695
  %v1078 = vpow.pop %v1077
  %v1079 = vadd.f32 %v1078, 1.0
  %v1080 = vrcp.pop %v1079
  %v1081 = vmul.f32 %v1079, %v1080
  %v1082 = vsub.f32 1.0, %v1081
  %v1083 = vmul.f32 %v1080, %v1082
  %v1084 = vadd.f32 %v1080, %v1083
  %vm1085 = vweird.f32 %v1079
  %vm1086 = vweird.f32 %v1080
  %vm1087 = vmor %vm1085, %vm1086
  %v1088 = vsel %vm1087, %v1080, %v1084
  %v1089 = vand.u32 2147483647, %v1079
  %vm1090 = vcmp.eq.f32.partialorder %v1089, 8.507059e+37
  %v1091 = vand.u32 %v1079, 2147483648
  %v1092 = vor.u32 1.1754944e-38, %v1091
  %v1093 = vsel %vm1090, %v1092, %v1088
  %v1094 = vmul.f32 1.0, %v1093
  %v1095 = vtanh.pop %v1075
  %v1096 = vmul.f32 %v1094, %v1043
  %1098 = vrot.lane.b32.xlu0 %v1095, 64
  %v1099 = vpop.permute.xlu0 %1098
  %v1101 = vmul.f32 %v1094, %v1099
  %1103 = vrot.lane.b32.xlu0 %v1101, 32
  %v1104 = vpop.permute.xlu0 %1103
  %v1106 = vadd.f32 %v1096, %v1104
  %v1107 = vtanh.pop %v1106
  %1109 = vrot.lane.b32.xlu0 %v1107, 64
  %v1110 = vpop.permute.xlu0 %1109
  %v1112 = vmul.f32 %v1094, %v1110
  %1114 = vrot.lane.b32.xlu0 %v1112, 32
  %v1115 = vpop.permute.xlu0 %1114
  %v1116 = vsel %vm116, %v1115, 0
  %1118 = vmatpush.msra.mxu0 0.0
  %1119 = vmatpush.msra.mxu0 0.0
  %1120 = vmatpush.msra.mxu0 0.0
  %1121 = vmatpush.msra.mxu0 0.0
  %1122 = vmatpush.msra.mxu0 0.0
  %1123 = vmatpush.msra.mxu0 0.0
  %1124 = vmatpush.msra.mxu0 0.0
  %1125 = vmatpush.msra.mxu0 0.0
  %1126 = vmatpush.msra.mxu0 0.0
  %1127 = vmatpush.msra.mxu0 0.0
  %1128 = vmatpush.msra.mxu0 0.0
  %1129 = vmatpush.msra.mxu0 0.0
  %1130 = vmatpush.msra.mxu0 %v676
  %1131 = vmatpush.msra.mxu0 %v675
  %1132 = vmatpush.msra.mxu0 %v674
  %1133 = vmatpush.msra.mxu0 %v673
  %1134 = vmatmul.f32.gmra.mxu0 %v1116
  %v1135 = vpop.f32.mrf.mxu0
  %v1136 = vadd.f32 0.0, %v1135
  %1137 = vdwg.mxu0
  %v1138 = vadd.f32 %v671, %v1136
  %v1139 = vxor.u32 %v1138, 2147483648
  %v1140 = vmul.f32 %v1139, 1.442695
  %v1141 = vpow.pop %v1140
  %v1142 = vadd.f32 %v1141, 1.0
  %v1143 = vrcp.pop %v1142
  %v1144 = vmul.f32 %v1142, %v1143
  %v1145 = vsub.f32 1.0, %v1144
  %v1146 = vmul.f32 %v1143, %v1145
  %v1147 = vadd.f32 %v1143, %v1146
  %vm1148 = vweird.f32 %v1142
  %vm1149 = vweird.f32 %v1143
  %vm1150 = vmor %vm1148, %vm1149
  %v1151 = vsel %vm1150, %v1143, %v1147
  %v1152 = vand.u32 2147483647, %v1142
  %vm1153 = vcmp.eq.f32.partialorder %v1152, 8.507059e+37
  %v1154 = vand.u32 %v1142, 2147483648
  %v1155 = vor.u32 1.1754944e-38, %v1154
  %v1156 = vsel %vm1153, %v1155, %v1151
  %v1157 = vmul.f32 1.0, %v1156
  %v1158 = vtanh.pop %v1138
  %v1159 = vmul.f32 %v1157, %v1106
  %1161 = vrot.lane.b32.xlu0 %v1158, 64
  %v1162 = vpop.permute.xlu0 %1161
  %v1164 = vmul.f32 %v1157, %v1162
  %1166 = vrot.lane.b32.xlu0 %v1164, 32
  %v1167 = vpop.permute.xlu0 %1166
  %v1169 = vadd.f32 %v1159, %v1167
  %v1170 = vtanh.pop %v1169
  %1172 = vrot.lane.b32.xlu0 %v1170, 64
  %v1173 = vpop.permute.xlu0 %1172
  %v1175 = vmul.f32 %v1157, %v1173
  %1177 = vrot.lane.b32.xlu0 %v1175, 32
  %v1178 = vpop.permute.xlu0 %1177
  %1180 = vst.msk [vmem:[%s7] sm:$0xff] %vm116, %v1178
  // Predicated region
  $region30: #{_lambda_.1} parent=0 // pred_check
    _
  $region31: #{_lambda_.1} parent=0 // pred_check_branch
    %1182 = sbr.rel (0) target = $region33
  $region32: #{_lambda_.1} parent=0 // pred_region
    _
  $region33: #{_lambda_.1} parent=0 // pred_fallthru
    _
  // Predicated region
  $region34: #{_lambda_.1} parent=0 // pred_check
    _
  $region35: #{_lambda_.1} parent=0 // pred_check_branch
    %1184 = sbr.rel (0) target = $region37
  $region36: #{_lambda_.1} parent=0 // pred_region
    _
  $region37: #{_lambda_.1} parent=0 // pred_fallthru
    _

</llo_original>
